<compile_context>
chip_gen: v7x
topology: tpu7x:2x2x1
jax: 0.10.0
libtpu: 0.0.40
codegen_flags: <defaults>
</compile_context>

<pallas_src>
import numpy as np
import jax
import jax.numpy as jnp
from jax import lax
from jax.experimental import pallas as pl
from jax.experimental.pallas import tpu as pltpu


def _lstm_kernel(x_ref, w_ihe_ref, b12_ref, w_comb_ref, w_lin_ref, b_lin_ref,
                 out_ref):
    """Whole sequence in one invocation (latency-bound recurrence; no grid).

    Shapes (all f32, already padded / column-permuted by the wrapper):
      x_ref      (T+1, B, I)   time-major, one extra all-zero timestep appended
      w_ihe_ref  (I, 8H)       layer-1 input weights scattered into the gate-
                               interleaved layout [i1 i2 f1 f2 g1 g2 o1 o2]
                               (layer-2 columns zero)
      b12_ref    (1, 8H)       [b1 | b2] in the same interleaved layout
      w_comb_ref (2H, 8H)      [[w_hh1, w_ih2],[0, w_hh2]], columns permuted the
                               same way; rows 0:H multiply h1, rows H:2H multiply h2
      w_lin_ref  (H, OUT_pad)  linear head (lane padded)
      b_lin_ref  (1, OUT_pad)
      out_ref    (B, OUT_pad)
    """
    Tp1, B, I = x_ref.shape
    H2, H8 = w_comb_ref.shape            # 2H, 8H
    H = H2 // 2
    T = Tp1 - 1

    # ---- off-chain precompute (independent of the recurrent state) --------
    # Input projection + both biases for every timestep, time-major so the
    # per-step read xib[t] is a leading-dim vreg select (no sublane gather).
    if I == 1:
        xib = x_ref[...] * w_ihe_ref[...] + b12_ref[...]          # (T+1, B, 8H)
    else:
        x_flat = x_ref[...].reshape(Tp1 * B, I)
        xib = (jnp.dot(x_flat, w_ihe_ref[...],
                       preferred_element_type=jnp.float32)
               + b12_ref[...]).reshape(Tp1, B, H8)

    # Hoisted constant vectors (JAX does not CSE broadcast_in_dim in loops).
    lane8 = lax.broadcasted_iota(jnp.int32, (B, H8), 1)
    g_lane = (lane8 >= 4 * H) & (lane8 < 6 * H)       # tanh ("g") gate lanes
    pre_scale = jnp.where(g_lane, 1.0, 0.5).astype(jnp.float32)
    post_off = jnp.where(g_lane, 0.0, 0.5).astype(jnp.float32)
    lane2 = lax.broadcasted_iota(jnp.int32, (B, H2), 1)
    l1_maskf = (lane2 < H).astype(jnp.float32)        # layer-1 lanes of (B, 2H)

    def act8(gg):
        # One EUP tanh pass over the full (B, 8H) gates of BOTH layers:
        # sigmoid(x) = 0.5*tanh(x/2) + 0.5 for i/f/o lanes, tanh for g lanes.
        th = jnp.tanh(gg * pre_scale)
        return th * pre_scale + post_off

    def split4(a):
        # gate-interleaved layout -> i|f|g|o, each (B, 2H) = [layer1 | layer2]
        return (a[:, 0:H2], a[:, H2:2 * H2],
                a[:, 2 * H2:3 * H2], a[:, 3 * H2:4 * H2])

    # ---- prologue: t = 0, layer 1 only (all initial states are zero) ------
    i12, _f12, g12, o12 = split4(act8(xib[0]))
    c12 = (i12 * g12) * l1_maskf          # c1(0) in lanes [0:H), zeros in [H:2H)
    h12 = o12 * jnp.tanh(c12)             # -> [h1(0) | h2(-1)=0]

    # ---- recurrence: ONE dependent matmul + ONE activation pass per step --
    # m cols (interleaved): layer-1 gates' h-part for step t+1 and layer-2
    # gates for step t; xib[t+1] supplies xi1(t+1) and b2.
    for t in range(T):
        m = jnp.dot(h12, w_comb_ref[...],            # ref read per iter: lets the
                    preferred_element_type=jnp.float32)  # compiler reload vs pin vregs
        i12, f12, g12, o12 = split4(act8(m + xib[t + 1]))
        c12 = f12 * c12 + i12 * g12                  # -> [c1(t+1) | c2(t)]
        h12 = o12 * jnp.tanh(c12)                    # -> [h1(t+1) | h2(t)]

    # ---- linear head on the last top-layer hidden state h2(T-1) -----------
    h2 = h12[:, H:H2]
    out_ref[...] = (jnp.dot(h2, w_lin_ref[...],
                            preferred_element_type=jnp.float32)
                    + b_lin_ref[...])


def _interleave_gate_cols(a_l1, a_l2, H):
    """Two (.., 4H) arrays in PyTorch gate order [i f g o] -> one (.., 8H)
    array laid out [i1 i2 f1 f2 g1 g2 o1 o2] (each block H wide)."""
    parts = []
    for q in range(4):
        parts.append(a_l1[..., q * H:(q + 1) * H])
        parts.append(a_l2[..., q * H:(q + 1) * H])
    return jnp.concatenate(parts, axis=-1)


def lstm_model_forward(x, p):
    B, T, I = x.shape
    H = p["w_hh1_t"].shape[0]
    OUT = p["w_lin_t"].shape[1]

    B_pad = max(8, ((B + 7) // 8) * 8)        # f32 sublane count
    OUT_pad = ((OUT + 127) // 128) * 128      # lane-dense output store

    # Time-major input with one extra all-zero timestep (keeps the fused
    # "layer-1@t+1 / layer-2@t" loop body uniform on the last iteration).
    x_tm = jnp.zeros((T + 1, B_pad, I), jnp.float32)
    x_tm = x_tm.at[:T, :B, :].set(jnp.transpose(x, (1, 0, 2)).astype(jnp.float32))

    # Weight plumbing done once in the wrapper (gate-interleaved column layout).
    w_ihe = _interleave_gate_cols(p["w_ih1_t"],
                                  jnp.zeros((I, 4 * H), jnp.float32), H)   # (I, 8H)
    b12 = _interleave_gate_cols(p["b1"], p["b2"], H)                        # (1, 8H)
    w_comb = jnp.concatenate([
        _interleave_gate_cols(p["w_hh1_t"], p["w_ih2_t"], H),               # rows: h1
        _interleave_gate_cols(jnp.zeros((H, 4 * H), jnp.float32),
                              p["w_hh2_t"], H),                             # rows: h2
    ], axis=0)                                                              # (2H, 8H)
    w_lin_pad = jnp.zeros((H, OUT_pad), jnp.float32).at[:, :OUT].set(p["w_lin_t"])
    b_lin_pad = jnp.zeros((1, OUT_pad), jnp.float32).at[:, :OUT].set(p["b_lin"])

    vmem = pl.BlockSpec(memory_space=pltpu.MemorySpace.VMEM)
    out = pl.pallas_call(
        _lstm_kernel,
        out_shape=jax.ShapeDtypeStruct((B_pad, OUT_pad), jnp.float32),
        in_specs=[vmem] * 6,
        out_specs=vmem,
        # TODO(synk): when serving many sequences, batch them into one call
        # (B padded to a multiple of 8); on v7x add a leading 'parallel' batch
        # grid axis to use the second TensorCore. Unnecessary at B=2.
    )(x_tm, w_ihe, b12, w_comb, w_lin_pad, b_lin_pad)

    return out[:B, :OUT, None]                # (B, OUT, 1) == unsqueeze(-1)


def init_params(key, input_size=1, hidden_size=32, output_len=390):
    """Deterministic synthetic params matching nn.LSTM(num_layers=2)+nn.Linear shapes."""
    H = hidden_size
    ks = jax.random.split(key, 10)
    s = 1.0 / np.sqrt(H)
    u = lambda k, shape: jax.random.uniform(k, shape, jnp.float32, -s, s)
    w_ih1 = u(ks[0], (4 * H, input_size))
    w_hh1 = u(ks[1], (4 * H, H))
    b_ih1 = u(ks[2], (4 * H,))
    b_hh1 = u(ks[3], (4 * H,))
    w_ih2 = u(ks[4], (4 * H, H))
    w_hh2 = u(ks[5], (4 * H, H))
    b_ih2 = u(ks[6], (4 * H,))
    b_hh2 = u(ks[7], (4 * H,))
    w_lin = u(ks[8], (output_len, H))
    b_lin = u(ks[9], (output_len,))
    return {
        "w_ih1_t": w_ih1.T, "w_hh1_t": w_hh1.T, "b1": (b_ih1 + b_hh1)[None, :],
        "w_ih2_t": w_ih2.T, "w_hh2_t": w_hh2.T, "b2": (b_ih2 + b_hh2)[None, :],
        "w_lin_t": w_lin.T, "b_lin": b_lin[None, :],
    }


def reference_forward(x, p):
    """Pure-JAX reference with identical semantics (PyTorch i,f,g,o gate order)."""
    B, T, I = x.shape
    H = p["w_hh1_t"].shape[0]
    h1 = c1 = h2 = c2 = jnp.zeros((B, H), jnp.float32)

    def cell(x_t, h, c, w_ih_t, w_hh_t, b):
        g = x_t @ w_ih_t + h @ w_hh_t + b
        i, f, gg, o = jnp.split(g, 4, axis=1)
        c_new = jax.nn.sigmoid(f) * c + jax.nn.sigmoid(i) * jnp.tanh(gg)
        h_new = jax.nn.sigmoid(o) * jnp.tanh(c_new)
        return h_new, c_new

    for t in range(T):
        h1, c1 = cell(x[:, t, :], h1, c1, p["w_ih1_t"], p["w_hh1_t"], p["b1"])
        h2, c2 = cell(h1, h2, c2, p["w_ih2_t"], p["w_hh2_t"], p["b2"])
    out = h2 @ p["w_lin_t"] + p["b_lin"]
    return out[:, :, None]


if __name__ == "__main__":
    B, T, I = 2, 8, 1          # batch=2, seq=8, input_size=1 (module default)
    H, OUT = 32, 390           # small hidden; output_len matches module default

    key = jax.random.PRNGKey(0)
    k_x, k_p = jax.random.split(key)
    x = jax.random.normal(k_x, (B, T, I), dtype=jnp.float32)
    params = init_params(k_p, input_size=I, hidden_size=H, output_len=OUT)

    y = jax.block_until_ready(lstm_model_forward(x, params))
    y_ref = jax.block_until_ready(reference_forward(x, params))

    assert y.shape == (B, OUT, 1), y.shape
    np.testing.assert_allclose(np.asarray(y), np.asarray(y_ref),
                               rtol=1e-4, atol=1e-5)
    print("KERNEL_OK")
</pallas_src>

<mosaic_0001>
module attributes {stable_mosaic.version = 11 : i64} {
  func.func @_lstm_kernel(%arg0: memref<9x8x1xf32, #tpu.memory_space<vmem>>, %arg1: memref<1x256xf32, #tpu.memory_space<vmem>>, %arg2: memref<1x256xf32, #tpu.memory_space<vmem>>, %arg3: memref<64x256xf32, #tpu.memory_space<vmem>>, %arg4: memref<32x512xf32, #tpu.memory_space<vmem>>, %arg5: memref<1x512xf32, #tpu.memory_space<vmem>>, %arg6: memref<8x512xf32, #tpu.memory_space<vmem>>) attributes {dimension_semantics = [], scalar_prefetch = 0 : i64, scratch_operands = 0 : i64, tpu.core_type = #tpu.core_type<tc>} {
    %c0 = arith.constant 0 : index
    %c0_0 = arith.constant 0 : index
    %c0_1 = arith.constant 0 : index
    %0 = vector.load %arg0[%c0, %c0_0, %c0_1] : memref<9x8x1xf32, #tpu.memory_space<vmem>>, vector<9x8x1xf32>
    %c0_2 = arith.constant 0 : index
    %c0_3 = arith.constant 0 : index
    %1 = vector.load %arg1[%c0_2, %c0_3] : memref<1x256xf32, #tpu.memory_space<vmem>>, vector<1x256xf32>
    %2 = vector.shape_cast %1 : vector<1x256xf32> to vector<1x1x256xf32>
    %3 = vector.broadcast %0 : vector<9x8x1xf32> to vector<9x8x256xf32>
    %4 = vector.broadcast %2 : vector<1x1x256xf32> to vector<9x8x256xf32>
    %5 = arith.mulf %3, %4 : vector<9x8x256xf32>
    %c0_4 = arith.constant 0 : index
    %c0_5 = arith.constant 0 : index
    %6 = vector.load %arg2[%c0_4, %c0_5] : memref<1x256xf32, #tpu.memory_space<vmem>>, vector<1x256xf32>
    %7 = vector.shape_cast %6 : vector<1x256xf32> to vector<1x1x256xf32>
    %8 = vector.broadcast %7 : vector<1x1x256xf32> to vector<9x8x256xf32>
    %9 = arith.addf %5, %8 : vector<9x8x256xf32>
    %10 = tpu.iota {dimensions = array<i32: 1>} : vector<8x256xi32>
    %c128_i32 = arith.constant 128 : i32
    %11 = vector.broadcast %c128_i32 : i32 to vector<8x256xi32>
    %12 = arith.cmpi sge, %10, %11 : vector<8x256xi32>
    %c192_i32 = arith.constant 192 : i32
    %13 = vector.broadcast %c192_i32 : i32 to vector<8x256xi32>
    %14 = arith.cmpi slt, %10, %13 : vector<8x256xi32>
    %15 = arith.andi %12, %14 : vector<8x256xi1>
    %cst = arith.constant 1.000000e+00 : f32
    %cst_6 = arith.constant 5.000000e-01 : f32
    %16 = vector.broadcast %cst : f32 to vector<8x256xf32>
    %17 = vector.broadcast %cst_6 : f32 to vector<8x256xf32>
    %18 = arith.select %15, %16, %17 : vector<8x256xi1>, vector<8x256xf32>
    %cst_7 = arith.constant 0.000000e+00 : f32
    %cst_8 = arith.constant 5.000000e-01 : f32
    %19 = vector.broadcast %cst_7 : f32 to vector<8x256xf32>
    %20 = vector.broadcast %cst_8 : f32 to vector<8x256xf32>
    %21 = arith.select %15, %19, %20 : vector<8x256xi1>, vector<8x256xf32>
    %22 = tpu.iota {dimensions = array<i32: 1>} : vector<8x64xi32>
    %c32_i32 = arith.constant 32 : i32
    %23 = vector.broadcast %c32_i32 : i32 to vector<8x64xi32>
    %24 = arith.cmpi slt, %22, %23 : vector<8x64xi32>
    %25 = arith.extui %24 : vector<8x64xi1> to vector<8x64xi32>
    %26 = arith.sitofp %25 : vector<8x64xi32> to vector<8x64xf32>
    %27 = vector.extract_strided_slice %9 {offsets = [0, 0, 0], sizes = [1, 8, 256], strides = [1, 1, 1]} : vector<9x8x256xf32> to vector<1x8x256xf32>
    %28 = vector.shape_cast %27 : vector<1x8x256xf32> to vector<8x256xf32>
    %29 = arith.mulf %28, %18 : vector<8x256xf32>
    %30 = math.tanh %29 : vector<8x256xf32>
    %31 = arith.mulf %30, %18 : vector<8x256xf32>
    %32 = arith.addf %31, %21 : vector<8x256xf32>
    %33 = vector.extract_strided_slice %32 {offsets = [0, 0], sizes = [8, 64], strides = [1, 1]} : vector<8x256xf32> to vector<8x64xf32>
    %34 = vector.extract_strided_slice %32 {offsets = [0, 128], sizes = [8, 64], strides = [1, 1]} : vector<8x256xf32> to vector<8x64xf32>
    %35 = vector.extract_strided_slice %32 {offsets = [0, 192], sizes = [8, 64], strides = [1, 1]} : vector<8x256xf32> to vector<8x64xf32>
    %36 = arith.mulf %33, %34 : vector<8x64xf32>
    %37 = arith.mulf %36, %26 : vector<8x64xf32>
    %38 = math.tanh %37 : vector<8x64xf32>
    %39 = arith.mulf %35, %38 : vector<8x64xf32>
    %c0_9 = arith.constant 0 : index
    %c0_10 = arith.constant 0 : index
    %40 = vector.load %arg3[%c0_9, %c0_10] : memref<64x256xf32, #tpu.memory_space<vmem>>, vector<64x256xf32>
    %cst_11 = arith.constant dense<0.000000e+00> : vector<8x256xf32>
    %41 = tpu.matmul %39, %40, %cst_11 {dimension_numbers = #tpu.dot_dimension_numbers<[1], [0], [0], [1], [0, 0, 1, 1], [], []>} : vector<8x64xf32>, vector<64x256xf32>, vector<8x256xf32> -> vector<8x256xf32>
    %42 = vector.extract_strided_slice %9 {offsets = [1, 0, 0], sizes = [1, 8, 256], strides = [1, 1, 1]} : vector<9x8x256xf32> to vector<1x8x256xf32>
    %43 = vector.shape_cast %42 : vector<1x8x256xf32> to vector<8x256xf32>
    %44 = arith.addf %41, %43 : vector<8x256xf32>
    %45 = arith.mulf %44, %18 : vector<8x256xf32>
    %46 = math.tanh %45 : vector<8x256xf32>
    %47 = arith.mulf %46, %18 : vector<8x256xf32>
    %48 = arith.addf %47, %21 : vector<8x256xf32>
    %49 = vector.extract_strided_slice %48 {offsets = [0, 0], sizes = [8, 64], strides = [1, 1]} : vector<8x256xf32> to vector<8x64xf32>
    %50 = vector.extract_strided_slice %48 {offsets = [0, 64], sizes = [8, 64], strides = [1, 1]} : vector<8x256xf32> to vector<8x64xf32>
    %51 = vector.extract_strided_slice %48 {offsets = [0, 128], sizes = [8, 64], strides = [1, 1]} : vector<8x256xf32> to vector<8x64xf32>
    %52 = vector.extract_strided_slice %48 {offsets = [0, 192], sizes = [8, 64], strides = [1, 1]} : vector<8x256xf32> to vector<8x64xf32>
    %53 = arith.mulf %50, %37 : vector<8x64xf32>
    %54 = arith.mulf %49, %51 : vector<8x64xf32>
    %55 = arith.addf %53, %54 : vector<8x64xf32>
    %56 = math.tanh %55 : vector<8x64xf32>
    %57 = arith.mulf %52, %56 : vector<8x64xf32>
    %c0_12 = arith.constant 0 : index
    %c0_13 = arith.constant 0 : index
    %58 = vector.load %arg3[%c0_12, %c0_13] : memref<64x256xf32, #tpu.memory_space<vmem>>, vector<64x256xf32>
    %cst_14 = arith.constant dense<0.000000e+00> : vector<8x256xf32>
    %59 = tpu.matmul %57, %58, %cst_14 {dimension_numbers = #tpu.dot_dimension_numbers<[1], [0], [0], [1], [0, 0, 1, 1], [], []>} : vector<8x64xf32>, vector<64x256xf32>, vector<8x256xf32> -> vector<8x256xf32>
    %60 = vector.extract_strided_slice %9 {offsets = [2, 0, 0], sizes = [1, 8, 256], strides = [1, 1, 1]} : vector<9x8x256xf32> to vector<1x8x256xf32>
    %61 = vector.shape_cast %60 : vector<1x8x256xf32> to vector<8x256xf32>
    %62 = arith.addf %59, %61 : vector<8x256xf32>
    %63 = arith.mulf %62, %18 : vector<8x256xf32>
    %64 = math.tanh %63 : vector<8x256xf32>
    %65 = arith.mulf %64, %18 : vector<8x256xf32>
    %66 = arith.addf %65, %21 : vector<8x256xf32>
    %67 = vector.extract_strided_slice %66 {offsets = [0, 0], sizes = [8, 64], strides = [1, 1]} : vector<8x256xf32> to vector<8x64xf32>
    %68 = vector.extract_strided_slice %66 {offsets = [0, 64], sizes = [8, 64], strides = [1, 1]} : vector<8x256xf32> to vector<8x64xf32>
    %69 = vector.extract_strided_slice %66 {offsets = [0, 128], sizes = [8, 64], strides = [1, 1]} : vector<8x256xf32> to vector<8x64xf32>
    %70 = vector.extract_strided_slice %66 {offsets = [0, 192], sizes = [8, 64], strides = [1, 1]} : vector<8x256xf32> to vector<8x64xf32>
    %71 = arith.mulf %68, %55 : vector<8x64xf32>
    %72 = arith.mulf %67, %69 : vector<8x64xf32>
    %73 = arith.addf %71, %72 : vector<8x64xf32>
    %74 = math.tanh %73 : vector<8x64xf32>
    %75 = arith.mulf %70, %74 : vector<8x64xf32>
    %c0_15 = arith.constant 0 : index
    %c0_16 = arith.constant 0 : index
    %76 = vector.load %arg3[%c0_15, %c0_16] : memref<64x256xf32, #tpu.memory_space<vmem>>, vector<64x256xf32>
    %cst_17 = arith.constant dense<0.000000e+00> : vector<8x256xf32>
    %77 = tpu.matmul %75, %76, %cst_17 {dimension_numbers = #tpu.dot_dimension_numbers<[1], [0], [0], [1], [0, 0, 1, 1], [], []>} : vector<8x64xf32>, vector<64x256xf32>, vector<8x256xf32> -> vector<8x256xf32>
    %78 = vector.extract_strided_slice %9 {offsets = [3, 0, 0], sizes = [1, 8, 256], strides = [1, 1, 1]} : vector<9x8x256xf32> to vector<1x8x256xf32>
    %79 = vector.shape_cast %78 : vector<1x8x256xf32> to vector<8x256xf32>
    %80 = arith.addf %77, %79 : vector<8x256xf32>
    %81 = arith.mulf %80, %18 : vector<8x256xf32>
    %82 = math.tanh %81 : vector<8x256xf32>
    %83 = arith.mulf %82, %18 : vector<8x256xf32>
    %84 = arith.addf %83, %21 : vector<8x256xf32>
    %85 = vector.extract_strided_slice %84 {offsets = [0, 0], sizes = [8, 64], strides = [1, 1]} : vector<8x256xf32> to vector<8x64xf32>
    %86 = vector.extract_strided_slice %84 {offsets = [0, 64], sizes = [8, 64], strides = [1, 1]} : vector<8x256xf32> to vector<8x64xf32>
    %87 = vector.extract_strided_slice %84 {offsets = [0, 128], sizes = [8, 64], strides = [1, 1]} : vector<8x256xf32> to vector<8x64xf32>
    %88 = vector.extract_strided_slice %84 {offsets = [0, 192], sizes = [8, 64], strides = [1, 1]} : vector<8x256xf32> to vector<8x64xf32>
    %89 = arith.mulf %86, %73 : vector<8x64xf32>
    %90 = arith.mulf %85, %87 : vector<8x64xf32>
    %91 = arith.addf %89, %90 : vector<8x64xf32>
    %92 = math.tanh %91 : vector<8x64xf32>
    %93 = arith.mulf %88, %92 : vector<8x64xf32>
    %c0_18 = arith.constant 0 : index
    %c0_19 = arith.constant 0 : index
    %94 = vector.load %arg3[%c0_18, %c0_19] : memref<64x256xf32, #tpu.memory_space<vmem>>, vector<64x256xf32>
    %cst_20 = arith.constant dense<0.000000e+00> : vector<8x256xf32>
    %95 = tpu.matmul %93, %94, %cst_20 {dimension_numbers = #tpu.dot_dimension_numbers<[1], [0], [0], [1], [0, 0, 1, 1], [], []>} : vector<8x64xf32>, vector<64x256xf32>, vector<8x256xf32> -> vector<8x256xf32>
    %96 = vector.extract_strided_slice %9 {offsets = [4, 0, 0], sizes = [1, 8, 256], strides = [1, 1, 1]} : vector<9x8x256xf32> to vector<1x8x256xf32>
    %97 = vector.shape_cast %96 : vector<1x8x256xf32> to vector<8x256xf32>
    %98 = arith.addf %95, %97 : vector<8x256xf32>
    %99 = arith.mulf %98, %18 : vector<8x256xf32>
    %100 = math.tanh %99 : vector<8x256xf32>
    %101 = arith.mulf %100, %18 : vector<8x256xf32>
    %102 = arith.addf %101, %21 : vector<8x256xf32>
    %103 = vector.extract_strided_slice %102 {offsets = [0, 0], sizes = [8, 64], strides = [1, 1]} : vector<8x256xf32> to vector<8x64xf32>
    %104 = vector.extract_strided_slice %102 {offsets = [0, 64], sizes = [8, 64], strides = [1, 1]} : vector<8x256xf32> to vector<8x64xf32>
    %105 = vector.extract_strided_slice %102 {offsets = [0, 128], sizes = [8, 64], strides = [1, 1]} : vector<8x256xf32> to vector<8x64xf32>
    %106 = vector.extract_strided_slice %102 {offsets = [0, 192], sizes = [8, 64], strides = [1, 1]} : vector<8x256xf32> to vector<8x64xf32>
    %107 = arith.mulf %104, %91 : vector<8x64xf32>
    %108 = arith.mulf %103, %105 : vector<8x64xf32>
    %109 = arith.addf %107, %108 : vector<8x64xf32>
    %110 = math.tanh %109 : vector<8x64xf32>
    %111 = arith.mulf %106, %110 : vector<8x64xf32>
    %c0_21 = arith.constant 0 : index
    %c0_22 = arith.constant 0 : index
    %112 = vector.load %arg3[%c0_21, %c0_22] : memref<64x256xf32, #tpu.memory_space<vmem>>, vector<64x256xf32>
    %cst_23 = arith.constant dense<0.000000e+00> : vector<8x256xf32>
    %113 = tpu.matmul %111, %112, %cst_23 {dimension_numbers = #tpu.dot_dimension_numbers<[1], [0], [0], [1], [0, 0, 1, 1], [], []>} : vector<8x64xf32>, vector<64x256xf32>, vector<8x256xf32> -> vector<8x256xf32>
    %114 = vector.extract_strided_slice %9 {offsets = [5, 0, 0], sizes = [1, 8, 256], strides = [1, 1, 1]} : vector<9x8x256xf32> to vector<1x8x256xf32>
    %115 = vector.shape_cast %114 : vector<1x8x256xf32> to vector<8x256xf32>
    %116 = arith.addf %113, %115 : vector<8x256xf32>
    %117 = arith.mulf %116, %18 : vector<8x256xf32>
    %118 = math.tanh %117 : vector<8x256xf32>
    %119 = arith.mulf %118, %18 : vector<8x256xf32>
    %120 = arith.addf %119, %21 : vector<8x256xf32>
    %121 = vector.extract_strided_slice %120 {offsets = [0, 0], sizes = [8, 64], strides = [1, 1]} : vector<8x256xf32> to vector<8x64xf32>
    %122 = vector.extract_strided_slice %120 {offsets = [0, 64], sizes = [8, 64], strides = [1, 1]} : vector<8x256xf32> to vector<8x64xf32>
    %123 = vector.extract_strided_slice %120 {offsets = [0, 128], sizes = [8, 64], strides = [1, 1]} : vector<8x256xf32> to vector<8x64xf32>
    %124 = vector.extract_strided_slice %120 {offsets = [0, 192], sizes = [8, 64], strides = [1, 1]} : vector<8x256xf32> to vector<8x64xf32>
    %125 = arith.mulf %122, %109 : vector<8x64xf32>
    %126 = arith.mulf %121, %123 : vector<8x64xf32>
    %127 = arith.addf %125, %126 : vector<8x64xf32>
    %128 = math.tanh %127 : vector<8x64xf32>
    %129 = arith.mulf %124, %128 : vector<8x64xf32>
    %c0_24 = arith.constant 0 : index
    %c0_25 = arith.constant 0 : index
    %130 = vector.load %arg3[%c0_24, %c0_25] : memref<64x256xf32, #tpu.memory_space<vmem>>, vector<64x256xf32>
    %cst_26 = arith.constant dense<0.000000e+00> : vector<8x256xf32>
    %131 = tpu.matmul %129, %130, %cst_26 {dimension_numbers = #tpu.dot_dimension_numbers<[1], [0], [0], [1], [0, 0, 1, 1], [], []>} : vector<8x64xf32>, vector<64x256xf32>, vector<8x256xf32> -> vector<8x256xf32>
    %132 = vector.extract_strided_slice %9 {offsets = [6, 0, 0], sizes = [1, 8, 256], strides = [1, 1, 1]} : vector<9x8x256xf32> to vector<1x8x256xf32>
    %133 = vector.shape_cast %132 : vector<1x8x256xf32> to vector<8x256xf32>
    %134 = arith.addf %131, %133 : vector<8x256xf32>
    %135 = arith.mulf %134, %18 : vector<8x256xf32>
    %136 = math.tanh %135 : vector<8x256xf32>
    %137 = arith.mulf %136, %18 : vector<8x256xf32>
    %138 = arith.addf %137, %21 : vector<8x256xf32>
    %139 = vector.extract_strided_slice %138 {offsets = [0, 0], sizes = [8, 64], strides = [1, 1]} : vector<8x256xf32> to vector<8x64xf32>
    %140 = vector.extract_strided_slice %138 {offsets = [0, 64], sizes = [8, 64], strides = [1, 1]} : vector<8x256xf32> to vector<8x64xf32>
    %141 = vector.extract_strided_slice %138 {offsets = [0, 128], sizes = [8, 64], strides = [1, 1]} : vector<8x256xf32> to vector<8x64xf32>
    %142 = vector.extract_strided_slice %138 {offsets = [0, 192], sizes = [8, 64], strides = [1, 1]} : vector<8x256xf32> to vector<8x64xf32>
    %143 = arith.mulf %140, %127 : vector<8x64xf32>
    %144 = arith.mulf %139, %141 : vector<8x64xf32>
    %145 = arith.addf %143, %144 : vector<8x64xf32>
    %146 = math.tanh %145 : vector<8x64xf32>
    %147 = arith.mulf %142, %146 : vector<8x64xf32>
    %c0_27 = arith.constant 0 : index
    %c0_28 = arith.constant 0 : index
    %148 = vector.load %arg3[%c0_27, %c0_28] : memref<64x256xf32, #tpu.memory_space<vmem>>, vector<64x256xf32>
    %cst_29 = arith.constant dense<0.000000e+00> : vector<8x256xf32>
    %149 = tpu.matmul %147, %148, %cst_29 {dimension_numbers = #tpu.dot_dimension_numbers<[1], [0], [0], [1], [0, 0, 1, 1], [], []>} : vector<8x64xf32>, vector<64x256xf32>, vector<8x256xf32> -> vector<8x256xf32>
    %150 = vector.extract_strided_slice %9 {offsets = [7, 0, 0], sizes = [1, 8, 256], strides = [1, 1, 1]} : vector<9x8x256xf32> to vector<1x8x256xf32>
    %151 = vector.shape_cast %150 : vector<1x8x256xf32> to vector<8x256xf32>
    %152 = arith.addf %149, %151 : vector<8x256xf32>
    %153 = arith.mulf %152, %18 : vector<8x256xf32>
    %154 = math.tanh %153 : vector<8x256xf32>
    %155 = arith.mulf %154, %18 : vector<8x256xf32>
    %156 = arith.addf %155, %21 : vector<8x256xf32>
    %157 = vector.extract_strided_slice %156 {offsets = [0, 0], sizes = [8, 64], strides = [1, 1]} : vector<8x256xf32> to vector<8x64xf32>
    %158 = vector.extract_strided_slice %156 {offsets = [0, 64], sizes = [8, 64], strides = [1, 1]} : vector<8x256xf32> to vector<8x64xf32>
    %159 = vector.extract_strided_slice %156 {offsets = [0, 128], sizes = [8, 64], strides = [1, 1]} : vector<8x256xf32> to vector<8x64xf32>
    %160 = vector.extract_strided_slice %156 {offsets = [0, 192], sizes = [8, 64], strides = [1, 1]} : vector<8x256xf32> to vector<8x64xf32>
    %161 = arith.mulf %158, %145 : vector<8x64xf32>
    %162 = arith.mulf %157, %159 : vector<8x64xf32>
    %163 = arith.addf %161, %162 : vector<8x64xf32>
    %164 = math.tanh %163 : vector<8x64xf32>
    %165 = arith.mulf %160, %164 : vector<8x64xf32>
    %c0_30 = arith.constant 0 : index
    %c0_31 = arith.constant 0 : index
    %166 = vector.load %arg3[%c0_30, %c0_31] : memref<64x256xf32, #tpu.memory_space<vmem>>, vector<64x256xf32>
    %cst_32 = arith.constant dense<0.000000e+00> : vector<8x256xf32>
    %167 = tpu.matmul %165, %166, %cst_32 {dimension_numbers = #tpu.dot_dimension_numbers<[1], [0], [0], [1], [0, 0, 1, 1], [], []>} : vector<8x64xf32>, vector<64x256xf32>, vector<8x256xf32> -> vector<8x256xf32>
    %168 = vector.extract_strided_slice %9 {offsets = [8, 0, 0], sizes = [1, 8, 256], strides = [1, 1, 1]} : vector<9x8x256xf32> to vector<1x8x256xf32>
    %169 = vector.shape_cast %168 : vector<1x8x256xf32> to vector<8x256xf32>
    %170 = arith.addf %167, %169 : vector<8x256xf32>
    %171 = arith.mulf %170, %18 : vector<8x256xf32>
    %172 = math.tanh %171 : vector<8x256xf32>
    %173 = arith.mulf %172, %18 : vector<8x256xf32>
    %174 = arith.addf %173, %21 : vector<8x256xf32>
    %175 = vector.extract_strided_slice %174 {offsets = [0, 0], sizes = [8, 64], strides = [1, 1]} : vector<8x256xf32> to vector<8x64xf32>
    %176 = vector.extract_strided_slice %174 {offsets = [0, 64], sizes = [8, 64], strides = [1, 1]} : vector<8x256xf32> to vector<8x64xf32>
    %177 = vector.extract_strided_slice %174 {offsets = [0, 128], sizes = [8, 64], strides = [1, 1]} : vector<8x256xf32> to vector<8x64xf32>
    %178 = vector.extract_strided_slice %174 {offsets = [0, 192], sizes = [8, 64], strides = [1, 1]} : vector<8x256xf32> to vector<8x64xf32>
    %179 = arith.mulf %176, %163 : vector<8x64xf32>
    %180 = arith.mulf %175, %177 : vector<8x64xf32>
    %181 = arith.addf %179, %180 : vector<8x64xf32>
    %182 = math.tanh %181 : vector<8x64xf32>
    %183 = arith.mulf %178, %182 : vector<8x64xf32>
    %184 = vector.extract_strided_slice %183 {offsets = [0, 32], sizes = [8, 32], strides = [1, 1]} : vector<8x64xf32> to vector<8x32xf32>
    %c0_33 = arith.constant 0 : index
    %c0_34 = arith.constant 0 : index
    %185 = vector.load %arg4[%c0_33, %c0_34] : memref<32x512xf32, #tpu.memory_space<vmem>>, vector<32x512xf32>
    %cst_35 = arith.constant dense<0.000000e+00> : vector<8x512xf32>
    %186 = tpu.matmul %184, %185, %cst_35 {dimension_numbers = #tpu.dot_dimension_numbers<[1], [0], [0], [1], [0, 0, 1, 1], [], []>} : vector<8x32xf32>, vector<32x512xf32>, vector<8x512xf32> -> vector<8x512xf32>
    %c0_36 = arith.constant 0 : index
    %c0_37 = arith.constant 0 : index
    %187 = vector.load %arg5[%c0_36, %c0_37] : memref<1x512xf32, #tpu.memory_space<vmem>>, vector<1x512xf32>
    %188 = vector.broadcast %187 : vector<1x512xf32> to vector<8x512xf32>
    %189 = arith.addf %186, %188 : vector<8x512xf32>
    %c0_38 = arith.constant 0 : index
    %c0_39 = arith.constant 0 : index
    %190 = vector.load %arg6[%c0_38, %c0_39] : memref<8x512xf32, #tpu.memory_space<vmem>>, vector<8x512xf32>
    tpu.vector_store %arg6[%c0_38, %c0_39], %189 {strides = array<i32>} : memref<8x512xf32, #tpu.memory_space<vmem>>, vector<8x512xf32>,
    return
  }
}

</mosaic_0001>

<llo_original>
// kernel: tpu_custom_call.1
$region0: #{tpu_custom_call.1}
  #allocation0 [shape = 'u32[]', space=smem, size = 0x4, offset = 0x4, fixed_abs, tag = 'smem constant byte address 0x4 - core index']
  #allocation1 [shape = 'u32[144,128]{1,0:T(1,128)}', space=vmem, size = 0x12000, scoped, tag = 'internal scratch']
  %s0 = inlined_call_operand.vmem [shape: f32[9,8,1], index: 0, kind: input, shape index: {}]
  %s1 = inlined_call_operand.vmem [shape: f32[1,256], index: 1, kind: input, shape index: {}]
  %s2 = inlined_call_operand.vmem [shape: f32[1,256], index: 2, kind: input, shape index: {}]
  %s3 = inlined_call_operand.hbm [shape: f32[64,256], index: 3, kind: input, shape index: {}]
  %s4 = inlined_call_operand.hbm [shape: f32[32,512], index: 4, kind: input, shape index: {}]
  %s5 = inlined_call_operand.vmem [shape: f32[1,512], index: 5, kind: input, shape index: {}]
  %s6 = inlined_call_operand.hbm [shape: f32[8,512], index: 6, kind: output, shape index: {}]
  %s7 = sld [smem:[#allocation0]]
  $region42: #{tpu_custom_call.1} parent=0
    _
  %s9 = ssub.s32 1, %s7
  %s10 = scalar_select 0, %s9, %s7
  $region1: #{tpu_custom_call.1} parent=0
    #allocation2 [shape = 'u8[65536]{0}', space=vmem, size = 0x10000, scoped, tag = 'input window, operand 3, single buffered']
    #allocation3 [shape = 's32[1]{0}', space=sflag, size = 0x4, scoped, tag = 'scoped memory for tpu_custom_call.1']
    #allocation4 [shape = 's32[1]{0}', space=sflag, size = 0x4, scoped, tag = 'scoped memory for tpu_custom_call.1']
    #allocation5 [shape = 'u8[65536]{0}', space=vmem, size = 0x10000, scoped, tag = 'input window, operand 4, single buffered']
    #allocation6 [shape = 's32[1]{0}', space=sflag, size = 0x4, scoped, tag = 'scoped memory for tpu_custom_call.1']
    #allocation7 [shape = 'u8[16384]{0}', space=vmem, size = 0x4000, scoped, tag = 'output window, operand 0, single buffered']
    %11 = vsyncpa [#allocation3], 0
    %12 = vsyncpa [#allocation6], 0
    %13 = vsyncpa [#allocation4], 0
    // Predicated region
    $region2: #{tpu_custom_call.1} parent=1 // pred_check
      _
    $region3: #{tpu_custom_call.1} parent=1 // pred_check_branch
      %15 = sbr.rel (0) target = $region5
    $region4: #{tpu_custom_call.1} parent=1 // pred_region
      _
    $region5: #{tpu_custom_call.1} parent=1 // pred_fallthru
      _
    // Predicated region
    $region6: #{tpu_custom_call.1} parent=1 // pred_check
      _
    $region7: #{tpu_custom_call.1} parent=1 // pred_check_branch
      %17 = sbr.rel (0) target = $region9
    $region8: #{tpu_custom_call.1} parent=1 // pred_region
      _
    $region9: #{tpu_custom_call.1} parent=1 // pred_fallthru
      _
    // Predicated region
    $region10: #{tpu_custom_call.1} parent=1 // pred_check
      _
    $region11: #{tpu_custom_call.1} parent=1 // pred_check_branch
      %19 = sbr.rel (0) target = $region13
    $region12: #{tpu_custom_call.1} parent=1 // pred_region
      _
    $region13: #{tpu_custom_call.1} parent=1 // pred_fallthru
      _
    // Predicated region
    $region14: #{tpu_custom_call.1} parent=1 // pred_check
      _
    $region15: #{tpu_custom_call.1} parent=1 // pred_check_branch
      %21 = sbr.rel (0) target = $region17
    $region16: #{tpu_custom_call.1} parent=1 // pred_region
      %s23 = ssub.s32 2048, 2048
      %24 = vsyncadd [#allocation3], %s23
      %s25 = sshll.u32 [#allocation2], 4
      %s26 = int_to_ptr.vmem [resolvable:$true] %s25
      %31 = dma.hbm_to_vmem [thread:$0]  %s3, 2048, %s26, [#allocation3], 256, 256, 16
    $region17: #{tpu_custom_call.1} parent=1 // pred_fallthru
      _
    // Predicated region
    $region18: #{tpu_custom_call.1} parent=1 // pred_check
      _
    $region19: #{tpu_custom_call.1} parent=1 // pred_check_branch
      %33 = sbr.rel (0) target = $region21
    $region20: #{tpu_custom_call.1} parent=1 // pred_region
      %s35 = ssub.s32 2048, 2048
      %36 = vsyncadd [#allocation6], %s35
      %s37 = sshll.u32 [#allocation5], 4
      %s38 = int_to_ptr.vmem [resolvable:$true] %s37
      %43 = dma.hbm_to_vmem [thread:$0]  %s4, 2048, %s38, [#allocation6], 512, 512, 32
    $region21: #{tpu_custom_call.1} parent=1 // pred_fallthru
      _
    // Predicated region
    $region22: #{tpu_custom_call.1} parent=1 // pred_check
      _
    $region23: #{tpu_custom_call.1} parent=1 // pred_check_branch
      %45 = sbr.rel (0) target = $region25
    $region24: #{tpu_custom_call.1} parent=1 // pred_region
      _
    $region25: #{tpu_custom_call.1} parent=1 // pred_fallthru
      _
    // Predicated region
    $region26: #{tpu_custom_call.1} parent=1 // pred_check
      _
    $region27: #{tpu_custom_call.1} parent=1 // pred_check_branch
      %47 = sbr.rel (0) target = $region29
    $region28: #{tpu_custom_call.1} parent=1 // pred_region
      %48 = dma.done [#allocation3], 2048
    $region29: #{tpu_custom_call.1} parent=1 // pred_fallthru
      _
    // Predicated region
    $region30: #{tpu_custom_call.1} parent=1 // pred_check
      _
    $region31: #{tpu_custom_call.1} parent=1 // pred_check_branch
      %50 = sbr.rel (0) target = $region33
    $region32: #{tpu_custom_call.1} parent=1 // pred_region
      %51 = dma.done [#allocation6], 2048
    $region33: #{tpu_custom_call.1} parent=1 // pred_fallthru
      _
    %v52 = vld [vmem:[%s0] sm:$0xff]
    %v53 = vld [vmem:[%s0 + $0x8] sm:$0xff]
    %v54 = vld [vmem:[%s0 + $0x10] sm:$0xff]
    %v55 = vld [vmem:[%s0 + $0x18] sm:$0xff]
    %v56 = vld [vmem:[%s0 + $0x20] sm:$0xff]
    %v57 = vld [vmem:[%s0 + $0x28] sm:$0xff]
    %v58 = vld [vmem:[%s0 + $0x30] sm:$0xff]
    %v59 = vld [vmem:[%s0 + $0x38] sm:$0xff]
    %v60 = vld [vmem:[%s0 + $0x40] sm:$0xff]
    %v61 = vld [vmem:[%s1] sm:$0x3]
    %63 = vset.pattern.permute.xlu0 0
    %64 = vperm.xlu0 %63, %v52
    %v65 = vpop.permute.xlu0 %64
    %68 = vset.pattern.permute.xlu0 0
    %69 = vperm.xlu0 %68, %v53
    %v70 = vpop.permute.xlu0 %69
    %73 = vset.pattern.permute.xlu0 0
    %74 = vperm.xlu0 %73, %v54
    %v75 = vpop.permute.xlu0 %74
    %78 = vset.pattern.permute.xlu0 0
    %79 = vperm.xlu0 %78, %v55
    %v80 = vpop.permute.xlu0 %79
    %83 = vset.pattern.permute.xlu0 0
    %84 = vperm.xlu0 %83, %v56
    %v85 = vpop.permute.xlu0 %84
    %88 = vset.pattern.permute.xlu0 0
    %89 = vperm.xlu0 %88, %v57
    %v90 = vpop.permute.xlu0 %89
    %93 = vset.pattern.permute.xlu0 0
    %94 = vperm.xlu0 %93, %v58
    %v95 = vpop.permute.xlu0 %94
    %98 = vset.pattern.permute.xlu0 0
    %99 = vperm.xlu0 %98, %v59
    %v100 = vpop.permute.xlu0 %99
    %103 = vset.pattern.permute.xlu0 0
    %104 = vperm.xlu0 %103, %v60
    %v105 = vpop.permute.xlu0 %104
    %v108 = vlaneseq
    %v109 = vshrl.u32 %v108, 7
    %v110 = vsub.s32 0, %v109
    %v111 = vrot.slane %v61, %v110
    %v112 = vlaneseq
    %v113 = vshrl.u32 %v112, 7
    %v114 = vsub.s32 1, %v113
    %v115 = vrot.slane %v61, %v114
    %v118 = vmul.f32 %v65, %v111
    %v119 = vmul.f32 %v65, %v115
    %v120 = vmul.f32 %v70, %v111
    %v121 = vmul.f32 %v70, %v115
    %v122 = vmul.f32 %v75, %v111
    %v123 = vmul.f32 %v75, %v115
    %v124 = vmul.f32 %v80, %v111
    %v125 = vmul.f32 %v80, %v115
    %v126 = vmul.f32 %v85, %v111
    %v127 = vmul.f32 %v85, %v115
    %v128 = vmul.f32 %v90, %v111
    %v129 = vmul.f32 %v90, %v115
    %v130 = vmul.f32 %v95, %v111
    %v131 = vmul.f32 %v95, %v115
    %v132 = vmul.f32 %v100, %v111
    %v133 = vmul.f32 %v100, %v115
    %v134 = vmul.f32 %v105, %v111
    %v135 = vmul.f32 %v105, %v115
    %v136 = vld [vmem:[%s2] sm:$0x3]
    %v138 = vlaneseq
    %v139 = vshrl.u32 %v138, 7
    %v140 = vsub.s32 0, %v139
    %v141 = vrot.slane %v136, %v140
    %v142 = vlaneseq
    %v143 = vshrl.u32 %v142, 7
    %v144 = vsub.s32 1, %v143
    %v145 = vrot.slane %v136, %v144
    %v148 = vadd.f32 %v118, %v141
    %v149 = vadd.f32 %v119, %v145
    %v150 = vadd.f32 %v120, %v141
    %v151 = vadd.f32 %v121, %v145
    %v152 = vadd.f32 %v122, %v141
    %v153 = vadd.f32 %v123, %v145
    %v154 = vadd.f32 %v124, %v141
    %v155 = vadd.f32 %v125, %v145
    %v156 = vadd.f32 %v126, %v141
    %v157 = vadd.f32 %v127, %v145
    %v158 = vadd.f32 %v128, %v141
    %v159 = vadd.f32 %v129, %v145
    %v160 = vadd.f32 %v130, %v141
    %v161 = vadd.f32 %v131, %v145
    %v162 = vadd.f32 %v132, %v141
    %v163 = vadd.f32 %v133, %v145
    %v164 = vadd.f32 %v134, %v141
    %v165 = vadd.f32 %v135, %v145
    %v166 = vlaneseq
    %v167 = vand.u32 %v166, 127
    %v168 = vadd.s32 %v167, 128
    %vm169 = vcmp.ge.s32.totalorder %v167, 128
    %vm170 = vcmp.ge.s32.totalorder %v168, 128
    %vm171 = vcmp.lt.s32.totalorder %v167, 192
    %vm172 = vcmp.lt.s32.totalorder %v168, 192
    %vm173 = vmand %vm169, %vm171
    %vm174 = vmand %vm170, %vm172
    %v175 = vsel %vm173, 1.0, 0.5
    %v176 = vsel %vm174, 1.0, 0.5
    %v177 = vsel %vm173, 0.0, 0.5
    %v178 = vsel %vm174, 0.0, 0.5
    %vm179 = vcmp.lt.s32.totalorder %v167, 32
    %v180 = vsel %vm179, 1, 0
    %v181 = vcvt.s32.f32 %v180
    %v182 = vmul.f32 %v148, %v175
    %v183 = vmul.f32 %v149, %v176
    %v184 = vtanh.pop %v182
    %v185 = vtanh.pop %v183
    %v186 = vmul.f32 %v184, %v175
    %v187 = vmul.f32 %v185, %v176
    %v188 = vadd.f32 %v186, %v177
    %v189 = vadd.f32 %v187, %v178
    %v190 = vmul.f32 %v188, %v189
    %v191 = vmul.f32 %v190, %v181
    %v192 = vtanh.pop %v191
    %194 = vrot.lane.b32.xlu0 %v192, 64
    %v195 = vpop.permute.xlu0 %194
    %v197 = vmul.f32 %v189, %v195
    %v198 = vld [vmem:[#allocation2] sm:$0xff]
    %v199 = vld [vmem:[#allocation2 + $0x8] sm:$0xff]
    %v200 = vld [vmem:[#allocation2 + $0x10] sm:$0xff]
    %v201 = vld [vmem:[#allocation2 + $0x18] sm:$0xff]
    %v202 = vld [vmem:[#allocation2 + $0x20] sm:$0xff]
    %v203 = vld [vmem:[#allocation2 + $0x28] sm:$0xff]
    %v204 = vld [vmem:[#allocation2 + $0x30] sm:$0xff]
    %v205 = vld [vmem:[#allocation2 + $0x38] sm:$0xff]
    %v206 = vld [vmem:[#allocation2 + $0x40] sm:$0xff]
    %v207 = vld [vmem:[#allocation2 + $0x48] sm:$0xff]
    %v208 = vld [vmem:[#allocation2 + $0x50] sm:$0xff]
    %v209 = vld [vmem:[#allocation2 + $0x58] sm:$0xff]
    %v210 = vld [vmem:[#allocation2 + $0x60] sm:$0xff]
    %v211 = vld [vmem:[#allocation2 + $0x68] sm:$0xff]
    %v212 = vld [vmem:[#allocation2 + $0x70] sm:$0xff]
    %v213 = vld [vmem:[#allocation2 + $0x78] sm:$0xff]
    %215 = vrot.lane.b32.xlu0 %v197, 64
    %v216 = vpop.permute.xlu0 %215
    %vm217 = vcmask 523264
    %v218 = vsel %vm217, %v216, 0
    %220 = vmatprep.subr.mxu0 %v199
    %221 = vmatpush1.msra.mxu0 %v198
    %222 = vmatprep.subr.mxu0 %v201
    %223 = vmatpush1.msra.mxu0 %v200
    %224 = vmatprep.subr.mxu0 %v203
    %225 = vmatpush1.msra.mxu0 %v202
    %226 = vmatprep.subr.mxu0 %v205
    %227 = vmatpush1.msra.mxu0 %v204
    %228 = vmatprep.subr.mxu0 %v207
    %229 = vmatpush1.msra.mxu0 %v206
    %230 = vmatprep.subr.mxu0 %v209
    %231 = vmatpush1.msra.mxu0 %v208
    %232 = vmatprep.subr.mxu0 %v211
    %233 = vmatpush1.msra.mxu0 %v210
    %234 = vmatprep.subr.mxu0 %v213
    %235 = vmatpush1.msra.mxu0 %v212
    %236 = vmatprep.subr.mxu0 0.0
    %237 = vmatpush1.msra.mxu0 0.0
    %238 = vmatprep.subr.mxu0 0.0
    %239 = vmatpush1.msra.mxu0 0.0
    %240 = vmatprep.subr.mxu0 0.0
    %241 = vmatpush1.msra.mxu0 0.0
    %242 = vmatprep.subr.mxu0 0.0
    %243 = vmatpush1.msra.mxu0 0.0
    %244 = vmatprep.subr.mxu0 0.0
    %245 = vmatpush1.msra.mxu0 0.0
    %246 = vmatprep.subr.mxu0 0.0
    %247 = vmatpush1.msra.mxu0 0.0
    %248 = vmatprep.subr.mxu0 0.0
    %249 = vmatpush1.msra.mxu0 0.0
    %250 = vmatprep.subr.mxu0 0.0
    %251 = vmatpush1.msra.mxu0 0.0
    %252 = vmatprep.subr.mxu0 0.0
    %253 = vmatpush1.msra.mxu0 0.0
    %254 = vmatprep.subr.mxu0 0.0
    %255 = vmatpush1.msra.mxu0 0.0
    %256 = vmatprep.subr.mxu0 0.0
    %257 = vmatpush1.msra.mxu0 0.0
    %258 = vmatprep.subr.mxu0 0.0
    %259 = vmatpush1.msra.mxu0 0.0
    %260 = vmatprep.subr.mxu0 0.0
    %261 = vmatpush1.msra.mxu0 0.0
    %262 = vmatprep.subr.mxu0 0.0
    %263 = vmatpush1.msra.mxu0 0.0
    %264 = vmatprep.subr.mxu0 0.0
    %265 = vmatpush1.msra.mxu0 0.0
    %266 = vmatprep.subr.mxu0 0.0
    %267 = vmatpush1.msra.mxu0 0.0
    %268 = vmatprep.subr.mxu0 0.0
    %269 = vmatpush1.msra.mxu0 0.0
    %270 = vmatprep.subr.mxu0 0.0
    %271 = vmatpush1.msra.mxu0 0.0
    %272 = vmatprep.subr.mxu0 0.0
    %273 = vmatpush1.msra.mxu0 0.0
    %274 = vmatprep.subr.mxu0 0.0
    %275 = vmatpush1.msra.mxu0 0.0
    %276 = vmatprep.subr.mxu0 0.0
    %277 = vmatpush1.msra.mxu0 0.0
    %278 = vmatprep.subr.mxu0 0.0
    %279 = vmatpush1.msra.mxu0 0.0
    %280 = vmatprep.subr.mxu0 0.0
    %281 = vmatpush1.msra.mxu0 0.0
    %282 = vmatprep.subr.mxu0 0.0
    %283 = vmatpush1.msra.mxu0 0.0
    %284 = vmatprep.mubr.f32.mxu0 0.0
    %285 = vmatmul.mubr.f32.gmra.mrb[0].mxu0 %v218
    %v286 = vpop.f32.mrb[0].mxu0
    %v287 = vadd.f32 %v150, %v286
    %v288 = vpop.f32.mrb[0].mxu0
    %v289 = vadd.f32 %v151, %v288
    %290 = vdwg.mxu0
    %v291 = vmul.f32 %v287, %v175
    %v292 = vmul.f32 %v289, %v176
    %v293 = vtanh.pop %v291
    %v294 = vtanh.pop %v292
    %v295 = vmul.f32 %v293, %v175
    %v296 = vmul.f32 %v294, %v176
    %v297 = vadd.f32 %v295, %v177
    %v298 = vadd.f32 %v296, %v178
    %300 = vrot.lane.b32.xlu0 %v191, 64
    %v301 = vpop.permute.xlu0 %300
    %v303 = vmul.f32 %v297, %v301
    %v304 = vmul.f32 %v297, %v298
    %306 = vrot.lane.b32.xlu0 %v304, 64
    %v307 = vpop.permute.xlu0 %306
    %v309 = vadd.f32 %v303, %v307
    %v310 = vtanh.pop %v309
    %v311 = vmul.f32 %v298, %v310
    %313 = vrot.lane.b32.xlu0 %v311, 64
    %v314 = vpop.permute.xlu0 %313
    %v315 = vsel %vm217, %v314, 0
    %317 = vmatprep.subr.mxu0 %v199
    %318 = vmatpush1.msra.mxu0 %v198
    %319 = vmatprep.subr.mxu0 %v201
    %320 = vmatpush1.msra.mxu0 %v200
    %321 = vmatprep.subr.mxu0 %v203
    %322 = vmatpush1.msra.mxu0 %v202
    %323 = vmatprep.subr.mxu0 %v205
    %324 = vmatpush1.msra.mxu0 %v204
    %325 = vmatprep.subr.mxu0 %v207
    %326 = vmatpush1.msra.mxu0 %v206
    %327 = vmatprep.subr.mxu0 %v209
    %328 = vmatpush1.msra.mxu0 %v208
    %329 = vmatprep.subr.mxu0 %v211
    %330 = vmatpush1.msra.mxu0 %v210
    %331 = vmatprep.subr.mxu0 %v213
    %332 = vmatpush1.msra.mxu0 %v212
    %333 = vmatprep.subr.mxu0 0.0
    %334 = vmatpush1.msra.mxu0 0.0
    %335 = vmatprep.subr.mxu0 0.0
    %336 = vmatpush1.msra.mxu0 0.0
    %337 = vmatprep.subr.mxu0 0.0
    %338 = vmatpush1.msra.mxu0 0.0
    %339 = vmatprep.subr.mxu0 0.0
    %340 = vmatpush1.msra.mxu0 0.0
    %341 = vmatprep.subr.mxu0 0.0
    %342 = vmatpush1.msra.mxu0 0.0
    %343 = vmatprep.subr.mxu0 0.0
    %344 = vmatpush1.msra.mxu0 0.0
    %345 = vmatprep.subr.mxu0 0.0
    %346 = vmatpush1.msra.mxu0 0.0
    %347 = vmatprep.subr.mxu0 0.0
    %348 = vmatpush1.msra.mxu0 0.0
    %349 = vmatprep.subr.mxu0 0.0
    %350 = vmatpush1.msra.mxu0 0.0
    %351 = vmatprep.subr.mxu0 0.0
    %352 = vmatpush1.msra.mxu0 0.0
    %353 = vmatprep.subr.mxu0 0.0
    %354 = vmatpush1.msra.mxu0 0.0
    %355 = vmatprep.subr.mxu0 0.0
    %356 = vmatpush1.msra.mxu0 0.0
    %357 = vmatprep.subr.mxu0 0.0
    %358 = vmatpush1.msra.mxu0 0.0
    %359 = vmatprep.subr.mxu0 0.0
    %360 = vmatpush1.msra.mxu0 0.0
    %361 = vmatprep.subr.mxu0 0.0
    %362 = vmatpush1.msra.mxu0 0.0
    %363 = vmatprep.subr.mxu0 0.0
    %364 = vmatpush1.msra.mxu0 0.0
    %365 = vmatprep.subr.mxu0 0.0
    %366 = vmatpush1.msra.mxu0 0.0
    %367 = vmatprep.subr.mxu0 0.0
    %368 = vmatpush1.msra.mxu0 0.0
    %369 = vmatprep.subr.mxu0 0.0
    %370 = vmatpush1.msra.mxu0 0.0
    %371 = vmatprep.subr.mxu0 0.0
    %372 = vmatpush1.msra.mxu0 0.0
    %373 = vmatprep.subr.mxu0 0.0
    %374 = vmatpush1.msra.mxu0 0.0
    %375 = vmatprep.subr.mxu0 0.0
    %376 = vmatpush1.msra.mxu0 0.0
    %377 = vmatprep.subr.mxu0 0.0
    %378 = vmatpush1.msra.mxu0 0.0
    %379 = vmatprep.subr.mxu0 0.0
    %380 = vmatpush1.msra.mxu0 0.0
    %381 = vmatprep.mubr.f32.mxu0 0.0
    %382 = vmatmul.mubr.f32.gmra.mrb[0].mxu0 %v315
    %v383 = vpop.f32.mrb[0].mxu0
    %v384 = vadd.f32 %v152, %v383
    %v385 = vpop.f32.mrb[0].mxu0
    %v386 = vadd.f32 %v153, %v385
    %387 = vdwg.mxu0
    %v388 = vmul.f32 %v384, %v175
    %v389 = vmul.f32 %v386, %v176
    %v390 = vtanh.pop %v388
    %v391 = vtanh.pop %v389
    %v392 = vmul.f32 %v390, %v175
    %v393 = vmul.f32 %v391, %v176
    %v394 = vadd.f32 %v392, %v177
    %v395 = vadd.f32 %v393, %v178
    %v396 = vmul.f32 %v394, %v309
    %v397 = vmul.f32 %v394, %v395
    %399 = vrot.lane.b32.xlu0 %v397, 64
    %v400 = vpop.permute.xlu0 %399
    %v402 = vadd.f32 %v396, %v400
    %v403 = vtanh.pop %v402
    %v404 = vmul.f32 %v395, %v403
    %406 = vrot.lane.b32.xlu0 %v404, 64
    %v407 = vpop.permute.xlu0 %406
    %v408 = vsel %vm217, %v407, 0
    %410 = vmatprep.subr.mxu0 %v199
    %411 = vmatpush1.msra.mxu0 %v198
    %412 = vmatprep.subr.mxu0 %v201
    %413 = vmatpush1.msra.mxu0 %v200
    %414 = vmatprep.subr.mxu0 %v203
    %415 = vmatpush1.msra.mxu0 %v202
    %416 = vmatprep.subr.mxu0 %v205
    %417 = vmatpush1.msra.mxu0 %v204
    %418 = vmatprep.subr.mxu0 %v207
    %419 = vmatpush1.msra.mxu0 %v206
    %420 = vmatprep.subr.mxu0 %v209
    %421 = vmatpush1.msra.mxu0 %v208
    %422 = vmatprep.subr.mxu0 %v211
    %423 = vmatpush1.msra.mxu0 %v210
    %424 = vmatprep.subr.mxu0 %v213
    %425 = vmatpush1.msra.mxu0 %v212
    %426 = vmatprep.subr.mxu0 0.0
    %427 = vmatpush1.msra.mxu0 0.0
    %428 = vmatprep.subr.mxu0 0.0
    %429 = vmatpush1.msra.mxu0 0.0
    %430 = vmatprep.subr.mxu0 0.0
    %431 = vmatpush1.msra.mxu0 0.0
    %432 = vmatprep.subr.mxu0 0.0
    %433 = vmatpush1.msra.mxu0 0.0
    %434 = vmatprep.subr.mxu0 0.0
    %435 = vmatpush1.msra.mxu0 0.0
    %436 = vmatprep.subr.mxu0 0.0
    %437 = vmatpush1.msra.mxu0 0.0
    %438 = vmatprep.subr.mxu0 0.0
    %439 = vmatpush1.msra.mxu0 0.0
    %440 = vmatprep.subr.mxu0 0.0
    %441 = vmatpush1.msra.mxu0 0.0
    %442 = vmatprep.subr.mxu0 0.0
    %443 = vmatpush1.msra.mxu0 0.0
    %444 = vmatprep.subr.mxu0 0.0
    %445 = vmatpush1.msra.mxu0 0.0
    %446 = vmatprep.subr.mxu0 0.0
    %447 = vmatpush1.msra.mxu0 0.0
    %448 = vmatprep.subr.mxu0 0.0
    %449 = vmatpush1.msra.mxu0 0.0
    %450 = vmatprep.subr.mxu0 0.0
    %451 = vmatpush1.msra.mxu0 0.0
    %452 = vmatprep.subr.mxu0 0.0
    %453 = vmatpush1.msra.mxu0 0.0
    %454 = vmatprep.subr.mxu0 0.0
    %455 = vmatpush1.msra.mxu0 0.0
    %456 = vmatprep.subr.mxu0 0.0
    %457 = vmatpush1.msra.mxu0 0.0
    %458 = vmatprep.subr.mxu0 0.0
    %459 = vmatpush1.msra.mxu0 0.0
    %460 = vmatprep.subr.mxu0 0.0
    %461 = vmatpush1.msra.mxu0 0.0
    %462 = vmatprep.subr.mxu0 0.0
    %463 = vmatpush1.msra.mxu0 0.0
    %464 = vmatprep.subr.mxu0 0.0
    %465 = vmatpush1.msra.mxu0 0.0
    %466 = vmatprep.subr.mxu0 0.0
    %467 = vmatpush1.msra.mxu0 0.0
    %468 = vmatprep.subr.mxu0 0.0
    %469 = vmatpush1.msra.mxu0 0.0
    %470 = vmatprep.subr.mxu0 0.0
    %471 = vmatpush1.msra.mxu0 0.0
    %472 = vmatprep.subr.mxu0 0.0
    %473 = vmatpush1.msra.mxu0 0.0
    %474 = vmatprep.mubr.f32.mxu0 0.0
    %475 = vmatmul.mubr.f32.gmra.mrb[0].mxu0 %v408
    %v476 = vpop.f32.mrb[0].mxu0
    %v477 = vadd.f32 %v154, %v476
    %v478 = vpop.f32.mrb[0].mxu0
    %v479 = vadd.f32 %v155, %v478
    %480 = vdwg.mxu0
    %v481 = vmul.f32 %v477, %v175
    %v482 = vmul.f32 %v479, %v176
    %v483 = vtanh.pop %v481
    %v484 = vtanh.pop %v482
    %v485 = vmul.f32 %v483, %v175
    %v486 = vmul.f32 %v484, %v176
    %v487 = vadd.f32 %v485, %v177
    %v488 = vadd.f32 %v486, %v178
    %v489 = vmul.f32 %v487, %v402
    %v490 = vmul.f32 %v487, %v488
    %492 = vrot.lane.b32.xlu0 %v490, 64
    %v493 = vpop.permute.xlu0 %492
    %v495 = vadd.f32 %v489, %v493
    %v496 = vtanh.pop %v495
    %v497 = vmul.f32 %v488, %v496
    %499 = vrot.lane.b32.xlu0 %v497, 64
    %v500 = vpop.permute.xlu0 %499
    %v501 = vsel %vm217, %v500, 0
    %503 = vmatprep.subr.mxu0 %v199
    %504 = vmatpush1.msra.mxu0 %v198
    %505 = vmatprep.subr.mxu0 %v201
    %506 = vmatpush1.msra.mxu0 %v200
    %507 = vmatprep.subr.mxu0 %v203
    %508 = vmatpush1.msra.mxu0 %v202
    %509 = vmatprep.subr.mxu0 %v205
    %510 = vmatpush1.msra.mxu0 %v204
    %511 = vmatprep.subr.mxu0 %v207
    %512 = vmatpush1.msra.mxu0 %v206
    %513 = vmatprep.subr.mxu0 %v209
    %514 = vmatpush1.msra.mxu0 %v208
    %515 = vmatprep.subr.mxu0 %v211
    %516 = vmatpush1.msra.mxu0 %v210
    %517 = vmatprep.subr.mxu0 %v213
    %518 = vmatpush1.msra.mxu0 %v212
    %519 = vmatprep.subr.mxu0 0.0
    %520 = vmatpush1.msra.mxu0 0.0
    %521 = vmatprep.subr.mxu0 0.0
    %522 = vmatpush1.msra.mxu0 0.0
    %523 = vmatprep.subr.mxu0 0.0
    %524 = vmatpush1.msra.mxu0 0.0
    %525 = vmatprep.subr.mxu0 0.0
    %526 = vmatpush1.msra.mxu0 0.0
    %527 = vmatprep.subr.mxu0 0.0
    %528 = vmatpush1.msra.mxu0 0.0
    %529 = vmatprep.subr.mxu0 0.0
    %530 = vmatpush1.msra.mxu0 0.0
    %531 = vmatprep.subr.mxu0 0.0
    %532 = vmatpush1.msra.mxu0 0.0
    %533 = vmatprep.subr.mxu0 0.0
    %534 = vmatpush1.msra.mxu0 0.0
    %535 = vmatprep.subr.mxu0 0.0
    %536 = vmatpush1.msra.mxu0 0.0
    %537 = vmatprep.subr.mxu0 0.0
    %538 = vmatpush1.msra.mxu0 0.0
    %539 = vmatprep.subr.mxu0 0.0
    %540 = vmatpush1.msra.mxu0 0.0
    %541 = vmatprep.subr.mxu0 0.0
    %542 = vmatpush1.msra.mxu0 0.0
    %543 = vmatprep.subr.mxu0 0.0
    %544 = vmatpush1.msra.mxu0 0.0
    %545 = vmatprep.subr.mxu0 0.0
    %546 = vmatpush1.msra.mxu0 0.0
    %547 = vmatprep.subr.mxu0 0.0
    %548 = vmatpush1.msra.mxu0 0.0
    %549 = vmatprep.subr.mxu0 0.0
    %550 = vmatpush1.msra.mxu0 0.0
    %551 = vmatprep.subr.mxu0 0.0
    %552 = vmatpush1.msra.mxu0 0.0
    %553 = vmatprep.subr.mxu0 0.0
    %554 = vmatpush1.msra.mxu0 0.0
    %555 = vmatprep.subr.mxu0 0.0
    %556 = vmatpush1.msra.mxu0 0.0
    %557 = vmatprep.subr.mxu0 0.0
    %558 = vmatpush1.msra.mxu0 0.0
    %559 = vmatprep.subr.mxu0 0.0
    %560 = vmatpush1.msra.mxu0 0.0
    %561 = vmatprep.subr.mxu0 0.0
    %562 = vmatpush1.msra.mxu0 0.0
    %563 = vmatprep.subr.mxu0 0.0
    %564 = vmatpush1.msra.mxu0 0.0
    %565 = vmatprep.subr.mxu0 0.0
    %566 = vmatpush1.msra.mxu0 0.0
    %567 = vmatprep.mubr.f32.mxu0 0.0
    %568 = vmatmul.mubr.f32.gmra.mrb[0].mxu0 %v501
    %v569 = vpop.f32.mrb[0].mxu0
    %v570 = vadd.f32 %v156, %v569
    %v571 = vpop.f32.mrb[0].mxu0
    %v572 = vadd.f32 %v157, %v571
    %573 = vdwg.mxu0
    %v574 = vmul.f32 %v570, %v175
    %v575 = vmul.f32 %v572, %v176
    %v576 = vtanh.pop %v574
    %v577 = vtanh.pop %v575
    %v578 = vmul.f32 %v576, %v175
    %v579 = vmul.f32 %v577, %v176
    %v580 = vadd.f32 %v578, %v177
    %v581 = vadd.f32 %v579, %v178
    %v582 = vmul.f32 %v580, %v495
    %v583 = vmul.f32 %v580, %v581
    %585 = vrot.lane.b32.xlu0 %v583, 64
    %v586 = vpop.permute.xlu0 %585
    %v588 = vadd.f32 %v582, %v586
    %v589 = vtanh.pop %v588
    %v590 = vmul.f32 %v581, %v589
    %592 = vrot.lane.b32.xlu0 %v590, 64
    %v593 = vpop.permute.xlu0 %592
    %v594 = vsel %vm217, %v593, 0
    %596 = vmatprep.subr.mxu0 %v199
    %597 = vmatpush1.msra.mxu0 %v198
    %598 = vmatprep.subr.mxu0 %v201
    %599 = vmatpush1.msra.mxu0 %v200
    %600 = vmatprep.subr.mxu0 %v203
    %601 = vmatpush1.msra.mxu0 %v202
    %602 = vmatprep.subr.mxu0 %v205
    %603 = vmatpush1.msra.mxu0 %v204
    %604 = vmatprep.subr.mxu0 %v207
    %605 = vmatpush1.msra.mxu0 %v206
    %606 = vmatprep.subr.mxu0 %v209
    %607 = vmatpush1.msra.mxu0 %v208
    %608 = vmatprep.subr.mxu0 %v211
    %609 = vmatpush1.msra.mxu0 %v210
    %610 = vmatprep.subr.mxu0 %v213
    %611 = vmatpush1.msra.mxu0 %v212
    %612 = vmatprep.subr.mxu0 0.0
    %613 = vmatpush1.msra.mxu0 0.0
    %614 = vmatprep.subr.mxu0 0.0
    %615 = vmatpush1.msra.mxu0 0.0
    %616 = vmatprep.subr.mxu0 0.0
    %617 = vmatpush1.msra.mxu0 0.0
    %618 = vmatprep.subr.mxu0 0.0
    %619 = vmatpush1.msra.mxu0 0.0
    %620 = vmatprep.subr.mxu0 0.0
    %621 = vmatpush1.msra.mxu0 0.0
    %622 = vmatprep.subr.mxu0 0.0
    %623 = vmatpush1.msra.mxu0 0.0
    %624 = vmatprep.subr.mxu0 0.0
    %625 = vmatpush1.msra.mxu0 0.0
    %626 = vmatprep.subr.mxu0 0.0
    %627 = vmatpush1.msra.mxu0 0.0
    %628 = vmatprep.subr.mxu0 0.0
    %629 = vmatpush1.msra.mxu0 0.0
    %630 = vmatprep.subr.mxu0 0.0
    %631 = vmatpush1.msra.mxu0 0.0
    %632 = vmatprep.subr.mxu0 0.0
    %633 = vmatpush1.msra.mxu0 0.0
    %634 = vmatprep.subr.mxu0 0.0
    %635 = vmatpush1.msra.mxu0 0.0
    %636 = vmatprep.subr.mxu0 0.0
    %637 = vmatpush1.msra.mxu0 0.0
    %638 = vmatprep.subr.mxu0 0.0
    %639 = vmatpush1.msra.mxu0 0.0
    %640 = vmatprep.subr.mxu0 0.0
    %641 = vmatpush1.msra.mxu0 0.0
    %642 = vmatprep.subr.mxu0 0.0
    %643 = vmatpush1.msra.mxu0 0.0
    %644 = vmatprep.subr.mxu0 0.0
    %645 = vmatpush1.msra.mxu0 0.0
    %646 = vmatprep.subr.mxu0 0.0
    %647 = vmatpush1.msra.mxu0 0.0
    %648 = vmatprep.subr.mxu0 0.0
    %649 = vmatpush1.msra.mxu0 0.0
    %650 = vmatprep.subr.mxu0 0.0
    %651 = vmatpush1.msra.mxu0 0.0
    %652 = vmatprep.subr.mxu0 0.0
    %653 = vmatpush1.msra.mxu0 0.0
    %654 = vmatprep.subr.mxu0 0.0
    %655 = vmatpush1.msra.mxu0 0.0
    %656 = vmatprep.subr.mxu0 0.0
    %657 = vmatpush1.msra.mxu0 0.0
    %658 = vmatprep.subr.mxu0 0.0
    %659 = vmatpush1.msra.mxu0 0.0
    %660 = vmatprep.mubr.f32.mxu0 0.0
    %661 = vmatmul.mubr.f32.gmra.mrb[0].mxu0 %v594
    %v662 = vpop.f32.mrb[0].mxu0
    %v663 = vadd.f32 %v158, %v662
    %v664 = vpop.f32.mrb[0].mxu0
    %v665 = vadd.f32 %v159, %v664
    %666 = vdwg.mxu0
    %v667 = vmul.f32 %v663, %v175
    %v668 = vmul.f32 %v665, %v176
    %v669 = vtanh.pop %v667
    %v670 = vtanh.pop %v668
    %v671 = vmul.f32 %v669, %v175
    %v672 = vmul.f32 %v670, %v176
    %v673 = vadd.f32 %v671, %v177
    %v674 = vadd.f32 %v672, %v178
    %v675 = vmul.f32 %v673, %v588
    %v676 = vmul.f32 %v673, %v674
    %678 = vrot.lane.b32.xlu0 %v676, 64
    %v679 = vpop.permute.xlu0 %678
    %v681 = vadd.f32 %v675, %v679
    %v682 = vtanh.pop %v681
    %v683 = vmul.f32 %v674, %v682
    %685 = vrot.lane.b32.xlu0 %v683, 64
    %v686 = vpop.permute.xlu0 %685
    %v687 = vsel %vm217, %v686, 0
    %689 = vmatprep.subr.mxu0 %v199
    %690 = vmatpush1.msra.mxu0 %v198
    %691 = vmatprep.subr.mxu0 %v201
    %692 = vmatpush1.msra.mxu0 %v200
    %693 = vmatprep.subr.mxu0 %v203
    %694 = vmatpush1.msra.mxu0 %v202
    %695 = vmatprep.subr.mxu0 %v205
    %696 = vmatpush1.msra.mxu0 %v204
    %697 = vmatprep.subr.mxu0 %v207
    %698 = vmatpush1.msra.mxu0 %v206
    %699 = vmatprep.subr.mxu0 %v209
    %700 = vmatpush1.msra.mxu0 %v208
    %701 = vmatprep.subr.mxu0 %v211
    %702 = vmatpush1.msra.mxu0 %v210
    %703 = vmatprep.subr.mxu0 %v213
    %704 = vmatpush1.msra.mxu0 %v212
    %705 = vmatprep.subr.mxu0 0.0
    %706 = vmatpush1.msra.mxu0 0.0
    %707 = vmatprep.subr.mxu0 0.0
    %708 = vmatpush1.msra.mxu0 0.0
    %709 = vmatprep.subr.mxu0 0.0
    %710 = vmatpush1.msra.mxu0 0.0
    %711 = vmatprep.subr.mxu0 0.0
    %712 = vmatpush1.msra.mxu0 0.0
    %713 = vmatprep.subr.mxu0 0.0
    %714 = vmatpush1.msra.mxu0 0.0
    %715 = vmatprep.subr.mxu0 0.0
    %716 = vmatpush1.msra.mxu0 0.0
    %717 = vmatprep.subr.mxu0 0.0
    %718 = vmatpush1.msra.mxu0 0.0
    %719 = vmatprep.subr.mxu0 0.0
    %720 = vmatpush1.msra.mxu0 0.0
    %721 = vmatprep.subr.mxu0 0.0
    %722 = vmatpush1.msra.mxu0 0.0
    %723 = vmatprep.subr.mxu0 0.0
    %724 = vmatpush1.msra.mxu0 0.0
    %725 = vmatprep.subr.mxu0 0.0
    %726 = vmatpush1.msra.mxu0 0.0
    %727 = vmatprep.subr.mxu0 0.0
    %728 = vmatpush1.msra.mxu0 0.0
    %729 = vmatprep.subr.mxu0 0.0
    %730 = vmatpush1.msra.mxu0 0.0
    %731 = vmatprep.subr.mxu0 0.0
    %732 = vmatpush1.msra.mxu0 0.0
    %733 = vmatprep.subr.mxu0 0.0
    %734 = vmatpush1.msra.mxu0 0.0
    %735 = vmatprep.subr.mxu0 0.0
    %736 = vmatpush1.msra.mxu0 0.0
    %737 = vmatprep.subr.mxu0 0.0
    %738 = vmatpush1.msra.mxu0 0.0
    %739 = vmatprep.subr.mxu0 0.0
    %740 = vmatpush1.msra.mxu0 0.0
    %741 = vmatprep.subr.mxu0 0.0
    %742 = vmatpush1.msra.mxu0 0.0
    %743 = vmatprep.subr.mxu0 0.0
    %744 = vmatpush1.msra.mxu0 0.0
    %745 = vmatprep.subr.mxu0 0.0
    %746 = vmatpush1.msra.mxu0 0.0
    %747 = vmatprep.subr.mxu0 0.0
    %748 = vmatpush1.msra.mxu0 0.0
    %749 = vmatprep.subr.mxu0 0.0
    %750 = vmatpush1.msra.mxu0 0.0
    %751 = vmatprep.subr.mxu0 0.0
    %752 = vmatpush1.msra.mxu0 0.0
    %753 = vmatprep.mubr.f32.mxu0 0.0
    %754 = vmatmul.mubr.f32.gmra.mrb[0].mxu0 %v687
    %v755 = vpop.f32.mrb[0].mxu0
    %v756 = vadd.f32 %v160, %v755
    %v757 = vpop.f32.mrb[0].mxu0
    %v758 = vadd.f32 %v161, %v757
    %759 = vdwg.mxu0
    %v760 = vmul.f32 %v756, %v175
    %v761 = vmul.f32 %v758, %v176
    %v762 = vtanh.pop %v760
    %v763 = vtanh.pop %v761
    %v764 = vmul.f32 %v762, %v175
    %v765 = vmul.f32 %v763, %v176
    %v766 = vadd.f32 %v764, %v177
    %v767 = vadd.f32 %v765, %v178
    %v768 = vmul.f32 %v766, %v681
    %v769 = vmul.f32 %v766, %v767
    %771 = vrot.lane.b32.xlu0 %v769, 64
    %v772 = vpop.permute.xlu0 %771
    %v774 = vadd.f32 %v768, %v772
    %v775 = vtanh.pop %v774
    %v776 = vmul.f32 %v767, %v775
    %778 = vrot.lane.b32.xlu0 %v776, 64
    %v779 = vpop.permute.xlu0 %778
    %v780 = vsel %vm217, %v779, 0
    %782 = vmatprep.subr.mxu0 %v199
    %783 = vmatpush1.msra.mxu0 %v198
    %784 = vmatprep.subr.mxu0 %v201
    %785 = vmatpush1.msra.mxu0 %v200
    %786 = vmatprep.subr.mxu0 %v203
    %787 = vmatpush1.msra.mxu0 %v202
    %788 = vmatprep.subr.mxu0 %v205
    %789 = vmatpush1.msra.mxu0 %v204
    %790 = vmatprep.subr.mxu0 %v207
    %791 = vmatpush1.msra.mxu0 %v206
    %792 = vmatprep.subr.mxu0 %v209
    %793 = vmatpush1.msra.mxu0 %v208
    %794 = vmatprep.subr.mxu0 %v211
    %795 = vmatpush1.msra.mxu0 %v210
    %796 = vmatprep.subr.mxu0 %v213
    %797 = vmatpush1.msra.mxu0 %v212
    %798 = vmatprep.subr.mxu0 0.0
    %799 = vmatpush1.msra.mxu0 0.0
    %800 = vmatprep.subr.mxu0 0.0
    %801 = vmatpush1.msra.mxu0 0.0
    %802 = vmatprep.subr.mxu0 0.0
    %803 = vmatpush1.msra.mxu0 0.0
    %804 = vmatprep.subr.mxu0 0.0
    %805 = vmatpush1.msra.mxu0 0.0
    %806 = vmatprep.subr.mxu0 0.0
    %807 = vmatpush1.msra.mxu0 0.0
    %808 = vmatprep.subr.mxu0 0.0
    %809 = vmatpush1.msra.mxu0 0.0
    %810 = vmatprep.subr.mxu0 0.0
    %811 = vmatpush1.msra.mxu0 0.0
    %812 = vmatprep.subr.mxu0 0.0
    %813 = vmatpush1.msra.mxu0 0.0
    %814 = vmatprep.subr.mxu0 0.0
    %815 = vmatpush1.msra.mxu0 0.0
    %816 = vmatprep.subr.mxu0 0.0
    %817 = vmatpush1.msra.mxu0 0.0
    %818 = vmatprep.subr.mxu0 0.0
    %819 = vmatpush1.msra.mxu0 0.0
    %820 = vmatprep.subr.mxu0 0.0
    %821 = vmatpush1.msra.mxu0 0.0
    %822 = vmatprep.subr.mxu0 0.0
    %823 = vmatpush1.msra.mxu0 0.0
    %824 = vmatprep.subr.mxu0 0.0
    %825 = vmatpush1.msra.mxu0 0.0
    %826 = vmatprep.subr.mxu0 0.0
    %827 = vmatpush1.msra.mxu0 0.0
    %828 = vmatprep.subr.mxu0 0.0
    %829 = vmatpush1.msra.mxu0 0.0
    %830 = vmatprep.subr.mxu0 0.0
    %831 = vmatpush1.msra.mxu0 0.0
    %832 = vmatprep.subr.mxu0 0.0
    %833 = vmatpush1.msra.mxu0 0.0
    %834 = vmatprep.subr.mxu0 0.0
    %835 = vmatpush1.msra.mxu0 0.0
    %836 = vmatprep.subr.mxu0 0.0
    %837 = vmatpush1.msra.mxu0 0.0
    %838 = vmatprep.subr.mxu0 0.0
    %839 = vmatpush1.msra.mxu0 0.0
    %840 = vmatprep.subr.mxu0 0.0
    %841 = vmatpush1.msra.mxu0 0.0
    %842 = vmatprep.subr.mxu0 0.0
    %843 = vmatpush1.msra.mxu0 0.0
    %844 = vmatprep.subr.mxu0 0.0
    %845 = vmatpush1.msra.mxu0 0.0
    %846 = vmatprep.mubr.f32.mxu0 0.0
    %847 = vmatmul.mubr.f32.gmra.mrb[0].mxu0 %v780
    %v848 = vpop.f32.mrb[0].mxu0
    %v849 = vadd.f32 %v162, %v848
    %v850 = vpop.f32.mrb[0].mxu0
    %v851 = vadd.f32 %v163, %v850
    %852 = vdwg.mxu0
    %v853 = vmul.f32 %v849, %v175
    %v854 = vmul.f32 %v851, %v176
    %v855 = vtanh.pop %v853
    %v856 = vtanh.pop %v854
    %v857 = vmul.f32 %v855, %v175
    %v858 = vmul.f32 %v856, %v176
    %v859 = vadd.f32 %v857, %v177
    %v860 = vadd.f32 %v858, %v178
    %v861 = vmul.f32 %v859, %v774
    %v862 = vmul.f32 %v859, %v860
    %864 = vrot.lane.b32.xlu0 %v862, 64
    %v865 = vpop.permute.xlu0 %864
    %v867 = vadd.f32 %v861, %v865
    %v868 = vtanh.pop %v867
    %v869 = vmul.f32 %v860, %v868
    %871 = vrot.lane.b32.xlu0 %v869, 64
    %v872 = vpop.permute.xlu0 %871
    %v873 = vsel %vm217, %v872, 0
    %875 = vmatprep.subr.mxu0 %v199
    %876 = vmatpush1.msra.mxu0 %v198
    %877 = vmatprep.subr.mxu0 %v201
    %878 = vmatpush1.msra.mxu0 %v200
    %879 = vmatprep.subr.mxu0 %v203
    %880 = vmatpush1.msra.mxu0 %v202
    %881 = vmatprep.subr.mxu0 %v205
    %882 = vmatpush1.msra.mxu0 %v204
    %883 = vmatprep.subr.mxu0 %v207
    %884 = vmatpush1.msra.mxu0 %v206
    %885 = vmatprep.subr.mxu0 %v209
    %886 = vmatpush1.msra.mxu0 %v208
    %887 = vmatprep.subr.mxu0 %v211
    %888 = vmatpush1.msra.mxu0 %v210
    %889 = vmatprep.subr.mxu0 %v213
    %890 = vmatpush1.msra.mxu0 %v212
    %891 = vmatprep.subr.mxu0 0.0
    %892 = vmatpush1.msra.mxu0 0.0
    %893 = vmatprep.subr.mxu0 0.0
    %894 = vmatpush1.msra.mxu0 0.0
    %895 = vmatprep.subr.mxu0 0.0
    %896 = vmatpush1.msra.mxu0 0.0
    %897 = vmatprep.subr.mxu0 0.0
    %898 = vmatpush1.msra.mxu0 0.0
    %899 = vmatprep.subr.mxu0 0.0
    %900 = vmatpush1.msra.mxu0 0.0
    %901 = vmatprep.subr.mxu0 0.0
    %902 = vmatpush1.msra.mxu0 0.0
    %903 = vmatprep.subr.mxu0 0.0
    %904 = vmatpush1.msra.mxu0 0.0
    %905 = vmatprep.subr.mxu0 0.0
    %906 = vmatpush1.msra.mxu0 0.0
    %907 = vmatprep.subr.mxu0 0.0
    %908 = vmatpush1.msra.mxu0 0.0
    %909 = vmatprep.subr.mxu0 0.0
    %910 = vmatpush1.msra.mxu0 0.0
    %911 = vmatprep.subr.mxu0 0.0
    %912 = vmatpush1.msra.mxu0 0.0
    %913 = vmatprep.subr.mxu0 0.0
    %914 = vmatpush1.msra.mxu0 0.0
    %915 = vmatprep.subr.mxu0 0.0
    %916 = vmatpush1.msra.mxu0 0.0
    %917 = vmatprep.subr.mxu0 0.0
    %918 = vmatpush1.msra.mxu0 0.0
    %919 = vmatprep.subr.mxu0 0.0
    %920 = vmatpush1.msra.mxu0 0.0
    %921 = vmatprep.subr.mxu0 0.0
    %922 = vmatpush1.msra.mxu0 0.0
    %923 = vmatprep.subr.mxu0 0.0
    %924 = vmatpush1.msra.mxu0 0.0
    %925 = vmatprep.subr.mxu0 0.0
    %926 = vmatpush1.msra.mxu0 0.0
    %927 = vmatprep.subr.mxu0 0.0
    %928 = vmatpush1.msra.mxu0 0.0
    %929 = vmatprep.subr.mxu0 0.0
    %930 = vmatpush1.msra.mxu0 0.0
    %931 = vmatprep.subr.mxu0 0.0
    %932 = vmatpush1.msra.mxu0 0.0
    %933 = vmatprep.subr.mxu0 0.0
    %934 = vmatpush1.msra.mxu0 0.0
    %935 = vmatprep.subr.mxu0 0.0
    %936 = vmatpush1.msra.mxu0 0.0
    %937 = vmatprep.subr.mxu0 0.0
    %938 = vmatpush1.msra.mxu0 0.0
    %939 = vmatprep.mubr.f32.mxu0 0.0
    %940 = vmatmul.mubr.f32.gmra.mrb[0].mxu0 %v873
    %v941 = vpop.f32.mrb[0].mxu0
    %v942 = vadd.f32 %v164, %v941
    %v943 = vpop.f32.mrb[0].mxu0
    %v944 = vadd.f32 %v165, %v943
    %945 = vdwg.mxu0
    %v946 = vmul.f32 %v942, %v175
    %v947 = vmul.f32 %v944, %v176
    %v948 = vtanh.pop %v946
    %v949 = vtanh.pop %v947
    %v950 = vmul.f32 %v948, %v175
    %v951 = vmul.f32 %v949, %v176
    %v952 = vadd.f32 %v950, %v177
    %v953 = vadd.f32 %v951, %v178
    %v954 = vmul.f32 %v952, %v867
    %v955 = vmul.f32 %v952, %v953
    %957 = vrot.lane.b32.xlu0 %v955, 64
    %v958 = vpop.permute.xlu0 %957
    %v960 = vadd.f32 %v954, %v958
    %v961 = vtanh.pop %v960
    %v962 = vmul.f32 %v953, %v961
    %v963 = vld [vmem:[#allocation5] sm:$0xff]
    %v964 = vld [vmem:[#allocation5 + $0x8] sm:$0xff]
    %v965 = vld [vmem:[#allocation5 + $0x10] sm:$0xff]
    %v966 = vld [vmem:[#allocation5 + $0x18] sm:$0xff]
    %v967 = vld [vmem:[#allocation5 + $0x20] sm:$0xff]
    %v968 = vld [vmem:[#allocation5 + $0x28] sm:$0xff]
    %v969 = vld [vmem:[#allocation5 + $0x30] sm:$0xff]
    %v970 = vld [vmem:[#allocation5 + $0x38] sm:$0xff]
    %v971 = vld [vmem:[#allocation5 + $0x40] sm:$0xff]
    %v972 = vld [vmem:[#allocation5 + $0x48] sm:$0xff]
    %v973 = vld [vmem:[#allocation5 + $0x50] sm:$0xff]
    %v974 = vld [vmem:[#allocation5 + $0x58] sm:$0xff]
    %v975 = vld [vmem:[#allocation5 + $0x60] sm:$0xff]
    %v976 = vld [vmem:[#allocation5 + $0x68] sm:$0xff]
    %v977 = vld [vmem:[#allocation5 + $0x70] sm:$0xff]
    %v978 = vld [vmem:[#allocation5 + $0x78] sm:$0xff]
    %v979 = vld [vmem:[%s5] sm:$0xf]
    %v981 = vlaneseq
    %v982 = vshrl.u32 %v981, 7
    %v983 = vsub.s32 0, %v982
    %v984 = vrot.slane %v979, %v983
    %v985 = vlaneseq
    %v986 = vshrl.u32 %v985, 7
    %v987 = vsub.s32 1, %v986
    %v988 = vrot.slane %v979, %v987
    %v989 = vlaneseq
    %v990 = vshrl.u32 %v989, 7
    %v991 = vsub.s32 2, %v990
    %v992 = vrot.slane %v979, %v991
    %v993 = vlaneseq
    %v994 = vshrl.u32 %v993, 7
    %v995 = vsub.s32 3, %v994
    %v996 = vrot.slane %v979, %v995
    %1002 = vrot.lane.b32.xlu0 %v962, 32
    %v1003 = vpop.permute.xlu0 %1002
    %vm1004 = vcmask 261120
    %v1005 = vsel %vm1004, %v1003, 0
    %1007 = vmatprep.subr.mxu0 %v964
    %1008 = vmatpush1.msra.mxu0 %v963
    %1009 = vmatprep.subr.mxu0 %v968
    %1010 = vmatpush1.msra.mxu0 %v967
    %1011 = vmatprep.subr.mxu0 %v972
    %1012 = vmatpush1.msra.mxu0 %v971
    %1013 = vmatprep.subr.mxu0 %v976
    %1014 = vmatpush1.msra.mxu0 %v975
    %1015 = vmatprep.subr.mxu0 0.0
    %1016 = vmatpush1.msra.mxu0 0.0
    %1017 = vmatprep.subr.mxu0 0.0
    %1018 = vmatpush1.msra.mxu0 0.0
    %1019 = vmatprep.subr.mxu0 0.0
    %1020 = vmatpush1.msra.mxu0 0.0
    %1021 = vmatprep.subr.mxu0 0.0
    %1022 = vmatpush1.msra.mxu0 0.0
    %1023 = vmatprep.subr.mxu0 0.0
    %1024 = vmatpush1.msra.mxu0 0.0
    %1025 = vmatprep.subr.mxu0 0.0
    %1026 = vmatpush1.msra.mxu0 0.0
    %1027 = vmatprep.subr.mxu0 0.0
    %1028 = vmatpush1.msra.mxu0 0.0
    %1029 = vmatprep.subr.mxu0 0.0
    %1030 = vmatpush1.msra.mxu0 0.0
    %1031 = vmatprep.subr.mxu0 0.0
    %1032 = vmatpush1.msra.mxu0 0.0
    %1033 = vmatprep.subr.mxu0 0.0
    %1034 = vmatpush1.msra.mxu0 0.0
    %1035 = vmatprep.subr.mxu0 0.0
    %1036 = vmatpush1.msra.mxu0 0.0
    %1037 = vmatprep.subr.mxu0 0.0
    %1038 = vmatpush1.msra.mxu0 0.0
    %1039 = vmatprep.subr.mxu0 0.0
    %1040 = vmatpush1.msra.mxu0 0.0
    %1041 = vmatprep.subr.mxu0 0.0
    %1042 = vmatpush1.msra.mxu0 0.0
    %1043 = vmatprep.subr.mxu0 0.0
    %1044 = vmatpush1.msra.mxu0 0.0
    %1045 = vmatprep.subr.mxu0 0.0
    %1046 = vmatpush1.msra.mxu0 0.0
    %1047 = vmatprep.subr.mxu0 0.0
    %1048 = vmatpush1.msra.mxu0 0.0
    %1049 = vmatprep.subr.mxu0 0.0
    %1050 = vmatpush1.msra.mxu0 0.0
    %1051 = vmatprep.subr.mxu0 0.0
    %1052 = vmatpush1.msra.mxu0 0.0
    %1053 = vmatprep.subr.mxu0 0.0
    %1054 = vmatpush1.msra.mxu0 0.0
    %1055 = vmatprep.subr.mxu0 0.0
    %1056 = vmatpush1.msra.mxu0 0.0
    %1057 = vmatprep.subr.mxu0 0.0
    %1058 = vmatpush1.msra.mxu0 0.0
    %1059 = vmatprep.subr.mxu0 0.0
    %1060 = vmatpush1.msra.mxu0 0.0
    %1061 = vmatprep.subr.mxu0 0.0
    %1062 = vmatpush1.msra.mxu0 0.0
    %1063 = vmatprep.subr.mxu0 0.0
    %1064 = vmatpush1.msra.mxu0 0.0
    %1065 = vmatprep.subr.mxu0 0.0
    %1066 = vmatpush1.msra.mxu0 0.0
    %1067 = vmatprep.subr.mxu0 0.0
    %1068 = vmatpush1.msra.mxu0 0.0
    %1069 = vmatprep.subr.mxu0 0.0
    %1070 = vmatpush1.msra.mxu0 0.0
    %1071 = vmatprep.mubr.f32.mxu0 0.0
    %1072 = vmatmul.mubr.f32.gmra.mrb[0].mxu0 %v1005
    %v1073 = vpop.f32.mrb[0].mxu0
    %v1074 = vadd.f32 %v984, %v1073
    %v1075 = vpop.f32.mrb[0].mxu0
    %v1076 = vadd.f32 %v988, %v1075
    %1077 = vdwg.mxu0
    %1078 = vmatprep.subr.mxu0 %v966
    %1079 = vmatpush1.msra.mxu0 %v965
    %1080 = vmatprep.subr.mxu0 %v970
    %1081 = vmatpush1.msra.mxu0 %v969
    %1082 = vmatprep.subr.mxu0 %v974
    %1083 = vmatpush1.msra.mxu0 %v973
    %1084 = vmatprep.subr.mxu0 %v978
    %1085 = vmatpush1.msra.mxu0 %v977
    %1086 = vmatprep.subr.mxu0 0.0
    %1087 = vmatpush1.msra.mxu0 0.0
    %1088 = vmatprep.subr.mxu0 0.0
    %1089 = vmatpush1.msra.mxu0 0.0
    %1090 = vmatprep.subr.mxu0 0.0
    %1091 = vmatpush1.msra.mxu0 0.0
    %1092 = vmatprep.subr.mxu0 0.0
    %1093 = vmatpush1.msra.mxu0 0.0
    %1094 = vmatprep.subr.mxu0 0.0
    %1095 = vmatpush1.msra.mxu0 0.0
    %1096 = vmatprep.subr.mxu0 0.0
    %1097 = vmatpush1.msra.mxu0 0.0
    %1098 = vmatprep.subr.mxu0 0.0
    %1099 = vmatpush1.msra.mxu0 0.0
    %1100 = vmatprep.subr.mxu0 0.0
    %1101 = vmatpush1.msra.mxu0 0.0
    %1102 = vmatprep.subr.mxu0 0.0
    %1103 = vmatpush1.msra.mxu0 0.0
    %1104 = vmatprep.subr.mxu0 0.0
    %1105 = vmatpush1.msra.mxu0 0.0
    %1106 = vmatprep.subr.mxu0 0.0
    %1107 = vmatpush1.msra.mxu0 0.0
    %1108 = vmatprep.subr.mxu0 0.0
    %1109 = vmatpush1.msra.mxu0 0.0
    %1110 = vmatprep.subr.mxu0 0.0
    %1111 = vmatpush1.msra.mxu0 0.0
    %1112 = vmatprep.subr.mxu0 0.0
    %1113 = vmatpush1.msra.mxu0 0.0
    %1114 = vmatprep.subr.mxu0 0.0
    %1115 = vmatpush1.msra.mxu0 0.0
    %1116 = vmatprep.subr.mxu0 0.0
    %1117 = vmatpush1.msra.mxu0 0.0
    %1118 = vmatprep.subr.mxu0 0.0
    %1119 = vmatpush1.msra.mxu0 0.0
    %1120 = vmatprep.subr.mxu0 0.0
    %1121 = vmatpush1.msra.mxu0 0.0
    %1122 = vmatprep.subr.mxu0 0.0
    %1123 = vmatpush1.msra.mxu0 0.0
    %1124 = vmatprep.subr.mxu0 0.0
    %1125 = vmatpush1.msra.mxu0 0.0
    %1126 = vmatprep.subr.mxu0 0.0
    %1127 = vmatpush1.msra.mxu0 0.0
    %1128 = vmatprep.subr.mxu0 0.0
    %1129 = vmatpush1.msra.mxu0 0.0
    %1130 = vmatprep.subr.mxu0 0.0
    %1131 = vmatpush1.msra.mxu0 0.0
    %1132 = vmatprep.subr.mxu0 0.0
    %1133 = vmatpush1.msra.mxu0 0.0
    %1134 = vmatprep.subr.mxu0 0.0
    %1135 = vmatpush1.msra.mxu0 0.0
    %1136 = vmatprep.subr.mxu0 0.0
    %1137 = vmatpush1.msra.mxu0 0.0
    %1138 = vmatprep.subr.mxu0 0.0
    %1139 = vmatpush1.msra.mxu0 0.0
    %1140 = vmatprep.subr.mxu0 0.0
    %1141 = vmatpush1.msra.mxu0 0.0
    %1142 = vmatprep.mubr.f32.mxu0 0.0
    %1143 = vmatmul.mubr.f32.gmra.mrb[0].mxu0 %v1005
    %v1144 = vpop.f32.mrb[0].mxu0
    %v1145 = vadd.f32 %v992, %v1144
    %v1146 = vpop.f32.mrb[0].mxu0
    %v1147 = vadd.f32 %v996, %v1146
    %1148 = vdwg.mxu0
    %1149 = vst [vmem:[#allocation7] sm:$0xff] %v1074
    %1150 = vst [vmem:[#allocation7 + $0x8] sm:$0xff] %v1076
    %1151 = vst [vmem:[#allocation7 + $0x10] sm:$0xff] %v1145
    %1152 = vst [vmem:[#allocation7 + $0x18] sm:$0xff] %v1147
    // Predicated region
    $region34: #{tpu_custom_call.1} parent=1 // pred_check
      _
    $region35: #{tpu_custom_call.1} parent=1 // pred_check_branch
      %1154 = sbr.rel (0) target = $region37
    $region36: #{tpu_custom_call.1} parent=1 // pred_region
      %s1156 = ssub.s32 512, 512
      %1157 = vsyncadd [#allocation4], %s1156
      %s1159 = sshll.u32 [#allocation7], 4
      %s1160 = int_to_ptr.vmem [resolvable:$true] %s1159
      %1162 = dma.vmem_to_hbm [thread:$0]  %s1160, 512, %s6, [#allocation4]
    $region37: #{tpu_custom_call.1} parent=1 // pred_fallthru
      _
    // Predicated region
    $region38: #{tpu_custom_call.1} parent=1 // pred_check
      _
    $region39: #{tpu_custom_call.1} parent=1 // pred_check_branch
      %1164 = sbr.rel (0) target = $region41
    $region40: #{tpu_custom_call.1} parent=1 // pred_region
      %1165 = dma.done [#allocation4], 512
    $region41: #{tpu_custom_call.1} parent=1 // pred_fallthru
      _
    %1166 = vsyncpa [#allocation3], 1
    %1167 = vsyncpa [#allocation6], 1
    %1168 = vsyncpa [#allocation4], 1

</llo_original>
